<compile_context>
chip_gen: v7x
topology: tpu7x:2x2x1
jax: 0.10.0
libtpu: 0.0.40
codegen_flags: <defaults>
</compile_context>

<pallas_src>
import jax
import jax.numpy as jnp
from jax.experimental import pallas as pl
from jax.experimental.pallas import tpu as pltpu

HIDDEN = 256
_TILE_MULT = 256      # multiple of 256 -> full-height MXU passes on v6e/v7x
_TILE_MAX = 1024      # per-step VMEM stays ~3 MB (h1/h2 f32 intermediates)


def _disc_kernel(obs_ref, act_ref, w1o_ref, w1a_ref, b1_ref,
                 w2_ref, b2_ref, w3_ref, b3_ref, o_ref):
    # obs: [TB, Do], act: [TB, Da] (any float dtype)
    # w1o: [Do, H] bf16, w1a: [Da, H] bf16, b1: [1, H] f32
    # w2 : [H, H] bf16,  b2: [1, H] f32
    # w3 : [1, H] bf16,  b3: [1]    f32 (SMEM scalar)
    # o  : [TB, 1] f32  (narrow store; masked vst cost is trivial)
    obs = obs_ref[...].astype(jnp.bfloat16)
    act = act_ref[...].astype(jnp.bfloat16)

    # Layer 1: fused "concat" as split matmul, f32 accumulation on the MXU.
    h1 = (jnp.dot(obs, w1o_ref[...], preferred_element_type=jnp.float32)
          + jnp.dot(act, w1a_ref[...], preferred_element_type=jnp.float32)
          + b1_ref[...])
    h1 = jnp.maximum(h1, 0.0).astype(jnp.bfloat16)     # ReLU (f32 VPU) -> bf16 for MXU

    # Layer 2 (dominant 256x256 matmul).
    h2 = jnp.dot(h1, w2_ref[...], preferred_element_type=jnp.float32) + b2_ref[...]
    h2 = jnp.maximum(h2, 0.0)                          # ReLU, f32 VPU

    # Layer 3 (out_features = 1): VPU multiply + XLU lane reduction instead of
    # a 1-lane MXU matmul.
    w3_row = w3_ref[...].astype(jnp.float32)           # (1, H)
    logits = jnp.sum(h2 * w3_row, axis=-1, keepdims=True) + b3_ref[0]
    o_ref[...] = jax.nn.sigmoid(logits)                # (TB, 1)


def _choose_tile_b(batch):
    """Multiple of 256 in [256, 1024]; keeps >= 2 grid steps when B allows."""
    if batch <= _TILE_MULT:
        return _TILE_MULT
    tile = (batch // (2 * _TILE_MULT)) * _TILE_MULT    # ~B/2 rounded to 256
    return max(_TILE_MULT, min(_TILE_MAX, tile))


def discriminator_forward(obs, actions, params):
    """Equivalent of DiscriminatorNetwork.forward(obs, actions) -> [B, 1]."""
    w1o, w1a, b1, w2, b2, w3, b3 = params
    B, obs_dim = obs.shape
    _, act_dim = actions.shape
    H = w1o.shape[1]

    tile_b = _choose_tile_b(B)
    steps = pl.cdiv(B, tile_b)
    padded_b = steps * tile_b
    if padded_b != B:
        # Padding the narrow (16/8-wide) inputs is cheap and keeps every block
        # (tile_b)-tall; the tail rows are sliced off the tiny output below.
        obs = jnp.pad(obs, ((0, padded_b - B), (0, 0)))
        actions = jnp.pad(actions, ((0, padded_b - B), (0, 0)))

    out = pl.pallas_call(
        _disc_kernel,
        out_shape=jax.ShapeDtypeStruct((padded_b, 1), jnp.float32),
        grid=(steps,),
        in_specs=[
            pl.BlockSpec((tile_b, obs_dim), lambda i: (i, 0)),
            pl.BlockSpec((tile_b, act_dim), lambda i: (i, 0)),
            # Constant index maps -> weights stay VMEM-resident across steps.
            pl.BlockSpec((obs_dim, H), lambda i: (0, 0)),
            pl.BlockSpec((act_dim, H), lambda i: (0, 0)),
            pl.BlockSpec((1, H), lambda i: (0, 0)),
            pl.BlockSpec((H, H), lambda i: (0, 0)),
            pl.BlockSpec((1, H), lambda i: (0, 0)),
            pl.BlockSpec((1, H), lambda i: (0, 0)),
            pl.BlockSpec(memory_space=pltpu.MemorySpace.SMEM),   # b3 scalar
        ],
        out_specs=pl.BlockSpec((tile_b, 1), lambda i: (i, 0)),
        compiler_params=pltpu.CompilerParams(
            dimension_semantics=("parallel",),
        ),
    )(obs, actions, w1o, w1a, b1, w2, b2, w3, b3)

    return out[:B] if padded_b != B else out


def init_params(key, observation_dim, action_dim, hidden=HIDDEN):
    """PyTorch-Linear-style uniform init; weights stored bf16, biases f32."""
    d_in = observation_dim + action_dim
    dims = [(d_in, hidden), (hidden, hidden), (hidden, 1)]
    raw = []
    for fan_in, fan_out in dims:
        key, kw, kb = jax.random.split(key, 3)
        bound = 1.0 / (fan_in ** 0.5)
        w = jax.random.uniform(kw, (fan_in, fan_out), jnp.float32, -bound, bound)
        b = jax.random.uniform(kb, (fan_out,), jnp.float32, -bound, bound)
        raw.append((w, b))
    (w1, b1), (w2, b2), (w3, b3) = raw

    w1_obs = w1[:observation_dim].astype(jnp.bfloat16)       # [Do, H]
    w1_act = w1[observation_dim:].astype(jnp.bfloat16)       # [Da, H]
    b1 = b1.reshape(1, hidden)
    w2 = w2.astype(jnp.bfloat16)                             # [H, H]
    b2 = b2.reshape(1, hidden)
    w3_row = w3.reshape(1, hidden).astype(jnp.bfloat16)      # [1, H]
    b3 = b3.reshape(1)                                       # [1] (SMEM scalar)
    return (w1_obs, w1_act, b1, w2, b2, w3_row, b3)


def _reference_forward(obs, actions, params):
    """Pure-JAX reference emulating the kernel's bf16-weight numerics.
    (Intentionally diverges from the f32 PyTorch model at the ~1e-3 level.)"""
    w1o, w1a, b1, w2, b2, w3, b3 = params
    f32 = jnp.float32
    obs_b = obs.astype(jnp.bfloat16).astype(f32)
    act_b = actions.astype(jnp.bfloat16).astype(f32)
    h1 = obs_b @ w1o.astype(f32) + act_b @ w1a.astype(f32) + b1
    h1 = jnp.maximum(h1, 0.0).astype(jnp.bfloat16).astype(f32)
    h2 = jnp.maximum(h1 @ w2.astype(f32) + b2, 0.0)
    logits = jnp.sum(h2 * w3.astype(f32), axis=-1, keepdims=True) + b3[0]
    return jax.nn.sigmoid(logits)


if __name__ == "__main__":
    observation_dim = 16
    action_dim = 8

    key = jax.random.PRNGKey(0)
    k_obs, k_act, k_par = jax.random.split(key, 3)
    params = init_params(k_par, observation_dim, action_dim)

    # batch=8   -> padded to one 256-row tile (small-batch path)
    # batch=640 -> non-divisible: pads to 768, grid of 3 x 256-row tiles
    # batch=1024-> divisible: grid of 2 x 512-row tiles (both v7x TCs usable)
    for batch in (8, 640, 1024):
        ko = jax.random.fold_in(k_obs, batch)
        ka = jax.random.fold_in(k_act, batch)
        obs = jax.random.normal(ko, (batch, observation_dim), jnp.float32)
        actions = jax.random.normal(ka, (batch, action_dim), jnp.float32)

        out = jax.block_until_ready(discriminator_forward(obs, actions, params))
        ref = jax.block_until_ready(_reference_forward(obs, actions, params))

        assert out.shape == (batch, 1), out.shape
        assert jnp.allclose(out, ref, atol=2e-3, rtol=2e-3), (
            float(jnp.max(jnp.abs(out - ref))))

    print("KERNEL_OK")
</pallas_src>

<mosaic_0001>
module attributes {stable_mosaic.version = 11 : i64} {
  func.func @_disc_kernel(%arg0: i32, %arg1: memref<256x16xf32, #tpu.memory_space<vmem>>, %arg2: memref<256x8xf32, #tpu.memory_space<vmem>>, %arg3: memref<16x256xbf16, #tpu.memory_space<vmem>>, %arg4: memref<8x256xbf16, #tpu.memory_space<vmem>>, %arg5: memref<1x256xf32, #tpu.memory_space<vmem>>, %arg6: memref<256x256xbf16, #tpu.memory_space<vmem>>, %arg7: memref<1x256xf32, #tpu.memory_space<vmem>>, %arg8: memref<1x256xbf16, #tpu.memory_space<vmem>>, %arg9: memref<1xf32, #tpu.memory_space<smem>>, %arg10: memref<256x1xf32, #tpu.memory_space<vmem>>) attributes {dimension_semantics = [#tpu.dimension_semantics<parallel>], iteration_bounds = array<i64: 1>, scalar_prefetch = 0 : i64, scratch_operands = 0 : i64, tpu.core_type = #tpu.core_type<tc>, window_params = [{transform_indices = @transform_0, window_bounds = array<i64: 256, 16>}, {transform_indices = @transform_1, window_bounds = array<i64: 256, 8>}, {pipeline_mode = #tpu.pipeline_mode<synchronous>, transform_indices = @transform_2, window_bounds = array<i64: 16, 256>}, {pipeline_mode = #tpu.pipeline_mode<synchronous>, transform_indices = @transform_3, window_bounds = array<i64: 8, 256>}, {pipeline_mode = #tpu.pipeline_mode<synchronous>, transform_indices = @transform_4, window_bounds = array<i64: 1, 256>}, {pipeline_mode = #tpu.pipeline_mode<synchronous>, transform_indices = @transform_5, window_bounds = array<i64: 256, 256>}, {pipeline_mode = #tpu.pipeline_mode<synchronous>, transform_indices = @transform_6, window_bounds = array<i64: 1, 256>}, {pipeline_mode = #tpu.pipeline_mode<synchronous>, transform_indices = @transform_7, window_bounds = array<i64: 1, 256>}, {transform_indices = @transform_8, window_bounds = array<i64: 1>}, {transform_indices = @transform_9, window_bounds = array<i64: 256, 1>}]} {
    %c0 = arith.constant 0 : index
    %c0_0 = arith.constant 0 : index
    %0 = vector.load %arg1[%c0, %c0_0] : memref<256x16xf32, #tpu.memory_space<vmem>>, vector<256x16xf32>
    %1 = arith.truncf %0 : vector<256x16xf32> to vector<256x16xbf16>
    %c0_1 = arith.constant 0 : index
    %c0_2 = arith.constant 0 : index
    %2 = vector.load %arg2[%c0_1, %c0_2] : memref<256x8xf32, #tpu.memory_space<vmem>>, vector<256x8xf32>
    %3 = arith.truncf %2 : vector<256x8xf32> to vector<256x8xbf16>
    %c0_3 = arith.constant 0 : index
    %c0_4 = arith.constant 0 : index
    %4 = vector.load %arg3[%c0_3, %c0_4] : memref<16x256xbf16, #tpu.memory_space<vmem>>, vector<16x256xbf16>
    %cst = arith.constant dense<0.000000e+00> : vector<256x256xf32>
    %5 = tpu.matmul %1, %4, %cst {dimension_numbers = #tpu.dot_dimension_numbers<[1], [0], [0], [1], [0, 0, 1, 1], [], []>} : vector<256x16xbf16>, vector<16x256xbf16>, vector<256x256xf32> -> vector<256x256xf32>
    %c0_5 = arith.constant 0 : index
    %c0_6 = arith.constant 0 : index
    %6 = vector.load %arg4[%c0_5, %c0_6] : memref<8x256xbf16, #tpu.memory_space<vmem>>, vector<8x256xbf16>
    %cst_7 = arith.constant dense<0.000000e+00> : vector<256x256xf32>
    %7 = tpu.matmul %3, %6, %cst_7 {dimension_numbers = #tpu.dot_dimension_numbers<[1], [0], [0], [1], [0, 0, 1, 1], [], []>} : vector<256x8xbf16>, vector<8x256xbf16>, vector<256x256xf32> -> vector<256x256xf32>
    %8 = arith.addf %5, %7 : vector<256x256xf32>
    %c0_8 = arith.constant 0 : index
    %c0_9 = arith.constant 0 : index
    %9 = vector.load %arg5[%c0_8, %c0_9] : memref<1x256xf32, #tpu.memory_space<vmem>>, vector<1x256xf32>
    %10 = vector.broadcast %9 : vector<1x256xf32> to vector<256x256xf32>
    %11 = arith.addf %8, %10 : vector<256x256xf32>
    %cst_10 = arith.constant 0.000000e+00 : f32
    %12 = vector.broadcast %cst_10 : f32 to vector<256x256xf32>
    %13 = arith.maximumf %11, %12 : vector<256x256xf32>
    %14 = arith.truncf %13 : vector<256x256xf32> to vector<256x256xbf16>
    %c0_11 = arith.constant 0 : index
    %c0_12 = arith.constant 0 : index
    %15 = vector.load %arg6[%c0_11, %c0_12] : memref<256x256xbf16, #tpu.memory_space<vmem>>, vector<256x256xbf16>
    %cst_13 = arith.constant dense<0.000000e+00> : vector<256x256xf32>
    %16 = tpu.matmul %14, %15, %cst_13 {dimension_numbers = #tpu.dot_dimension_numbers<[1], [0], [0], [1], [0, 0, 1, 1], [], []>} : vector<256x256xbf16>, vector<256x256xbf16>, vector<256x256xf32> -> vector<256x256xf32>
    %c0_14 = arith.constant 0 : index
    %c0_15 = arith.constant 0 : index
    %17 = vector.load %arg7[%c0_14, %c0_15] : memref<1x256xf32, #tpu.memory_space<vmem>>, vector<1x256xf32>
    %18 = vector.broadcast %17 : vector<1x256xf32> to vector<256x256xf32>
    %19 = arith.addf %16, %18 : vector<256x256xf32>
    %cst_16 = arith.constant 0.000000e+00 : f32
    %20 = vector.broadcast %cst_16 : f32 to vector<256x256xf32>
    %21 = arith.maximumf %19, %20 : vector<256x256xf32>
    %c0_17 = arith.constant 0 : index
    %c0_18 = arith.constant 0 : index
    %22 = vector.load %arg8[%c0_17, %c0_18] : memref<1x256xbf16, #tpu.memory_space<vmem>>, vector<1x256xbf16>
    %23 = arith.extf %22 : vector<1x256xbf16> to vector<1x256xf32>
    %24 = vector.broadcast %23 : vector<1x256xf32> to vector<256x256xf32>
    %25 = arith.mulf %21, %24 : vector<256x256xf32>
    %cst_19 = arith.constant dense<0.000000e+00> : vector<256xf32>
    %26 = vector.multi_reduction <add>, %25, %cst_19 [1] : vector<256x256xf32> to vector<256xf32>
    %27 = vector.shape_cast %26 : vector<256xf32> to vector<256x1xf32>
    %c0_20 = arith.constant 0 : index
    %28 = memref.load %arg9[%c0_20] : memref<1xf32, #tpu.memory_space<smem>>
    %29 = vector.broadcast %28 : f32 to vector<256x1xf32>
    %30 = arith.addf %27, %29 : vector<256x1xf32>
    %31 = arith.negf %30 : vector<256x1xf32>
    %32 = math.exp %31 : vector<256x1xf32>
    %cst_21 = arith.constant 1.000000e+00 : f32
    %33 = vector.broadcast %cst_21 : f32 to vector<256x1xf32>
    %34 = arith.addf %33, %32 : vector<256x1xf32>
    %35 = arith.divf %33, %34 : vector<256x1xf32>
    %c0_22 = arith.constant 0 : index
    %c0_23 = arith.constant 0 : index
    %36 = vector.load %arg10[%c0_22, %c0_23] : memref<256x1xf32, #tpu.memory_space<vmem>>, vector<256x1xf32>
    tpu.vector_store %arg10[%c0_22, %c0_23], %35 {strides = array<i32>} : memref<256x1xf32, #tpu.memory_space<vmem>>, vector<256x1xf32>,
    return
  }
  func.func @transform_0(%arg0: i32) -> (i32, i32) {
    %c0_i32 = arith.constant 0 : i32
    %c0_i32_0 = arith.constant 0 : i32
    return %arg0, %c0_i32 : i32, i32
  }
  func.func @transform_1(%arg0: i32) -> (i32, i32) {
    %c0_i32 = arith.constant 0 : i32
    %c0_i32_0 = arith.constant 0 : i32
    return %arg0, %c0_i32 : i32, i32
  }
  func.func @transform_2(%arg0: i32) -> (i32, i32) {
    %c0_i32 = arith.constant 0 : i32
    %c0_i32_0 = arith.constant 0 : i32
    %c0_i32_1 = arith.constant 0 : i32
    return %c0_i32, %c0_i32_0 : i32, i32
  }
  func.func @transform_3(%arg0: i32) -> (i32, i32) {
    %c0_i32 = arith.constant 0 : i32
    %c0_i32_0 = arith.constant 0 : i32
    %c0_i32_1 = arith.constant 0 : i32
    return %c0_i32, %c0_i32_0 : i32, i32
  }
  func.func @transform_4(%arg0: i32) -> (i32, i32) {
    %c0_i32 = arith.constant 0 : i32
    %c0_i32_0 = arith.constant 0 : i32
    %c0_i32_1 = arith.constant 0 : i32
    return %c0_i32, %c0_i32_0 : i32, i32
  }
  func.func @transform_5(%arg0: i32) -> (i32, i32) {
    %c0_i32 = arith.constant 0 : i32
    %c0_i32_0 = arith.constant 0 : i32
    %c0_i32_1 = arith.constant 0 : i32
    return %c0_i32, %c0_i32_0 : i32, i32
  }
  func.func @transform_6(%arg0: i32) -> (i32, i32) {
    %c0_i32 = arith.constant 0 : i32
    %c0_i32_0 = arith.constant 0 : i32
    %c0_i32_1 = arith.constant 0 : i32
    return %c0_i32, %c0_i32_0 : i32, i32
  }
  func.func @transform_7(%arg0: i32) -> (i32, i32) {
    %c0_i32 = arith.constant 0 : i32
    %c0_i32_0 = arith.constant 0 : i32
    %c0_i32_1 = arith.constant 0 : i32
    return %c0_i32, %c0_i32_0 : i32, i32
  }
  func.func @transform_8(%arg0: i32) -> i32 {
    %c0_i32 = arith.constant 0 : i32
    %c0_i32_0 = arith.constant 0 : i32
    return %c0_i32 : i32
  }
  func.func @transform_9(%arg0: i32) -> (i32, i32) {
    %c0_i32 = arith.constant 0 : i32
    %c0_i32_0 = arith.constant 0 : i32
    return %arg0, %c0_i32 : i32, i32
  }
}

</mosaic_0001>

<llo_original>
// kernel: tpu_custom_call.1
$region0: #{tpu_custom_call.1}
  #allocation0 [shape = 'u32[]', space=smem, size = 0x4, offset = 0x4, fixed_abs, tag = 'smem constant byte address 0x4 - core index']
  #allocation1 [shape = 'u32[144,128]{1,0:T(1,128)}', space=vmem, size = 0x12000, scoped, tag = 'internal scratch']
  #allocation2 [shape = 'f32[1]{0:T(128)S(6)}', space=smem, size = 0x200, scoped, tag = 'scoped memory for tpu_custom_call.1']
  %s0 = inlined_call_operand.vmem [shape: f32[256,16], index: 0, kind: input, shape index: {}]
  %s1 = inlined_call_operand.vmem [shape: f32[256,8], index: 1, kind: input, shape index: {}]
  %s2 = inlined_call_operand.vmem [shape: bf16[16,256], index: 2, kind: input, shape index: {}]
  %s3 = inlined_call_operand.vmem [shape: bf16[8,256], index: 3, kind: input, shape index: {}]
  %s4 = inlined_call_operand.vmem [shape: f32[1,256], index: 4, kind: input, shape index: {}]
  %s5 = inlined_call_operand.vmem [shape: bf16[256,256], index: 5, kind: input, shape index: {}]
  %s6 = inlined_call_operand.vmem [shape: f32[1,256], index: 6, kind: input, shape index: {}]
  %s7 = inlined_call_operand.vmem [shape: bf16[1,256], index: 7, kind: input, shape index: {}]
  %s8 = inlined_call_operand.<no memory space> [shape: f32[1], index: 8, kind: input, shape index: {}]
  %s9 = inlined_call_operand.vmem [shape: f32[256,1], index: 9, kind: output, shape index: {}]
  %s10 = sld [smem:[#allocation0]]
  $region46: #{tpu_custom_call.1} parent=0
    _
  %s12 = ssub.s32 1, %s10
  %s13 = scalar_select 0, %s12, %s10
  %14 = sst [smem:[#allocation2]] %s8
  // Predicated region
  $region2: #{tpu_custom_call.1} parent=0 // pred_check
    _
  $region3: #{tpu_custom_call.1} parent=0 // pred_check_branch
    %16 = sbr.rel (0) target = $region5
  $region4: #{tpu_custom_call.1} parent=0 // pred_region
    _
  $region5: #{tpu_custom_call.1} parent=0 // pred_fallthru
    _
  // Predicated region
  $region6: #{tpu_custom_call.1} parent=0 // pred_check
    _
  $region7: #{tpu_custom_call.1} parent=0 // pred_check_branch
    %18 = sbr.rel (0) target = $region9
  $region8: #{tpu_custom_call.1} parent=0 // pred_region
    _
  $region9: #{tpu_custom_call.1} parent=0 // pred_fallthru
    _
  // Predicated region
  $region10: #{tpu_custom_call.1} parent=0 // pred_check
    _
  $region11: #{tpu_custom_call.1} parent=0 // pred_check_branch
    %20 = sbr.rel (0) target = $region13
  $region12: #{tpu_custom_call.1} parent=0 // pred_region
    _
  $region13: #{tpu_custom_call.1} parent=0 // pred_fallthru
    _
  // Predicated region
  $region14: #{tpu_custom_call.1} parent=0 // pred_check
    _
  $region15: #{tpu_custom_call.1} parent=0 // pred_check_branch
    %22 = sbr.rel (0) target = $region17
  $region16: #{tpu_custom_call.1} parent=0 // pred_region
    _
  $region17: #{tpu_custom_call.1} parent=0 // pred_fallthru
    _
  // Predicated region
  $region18: #{tpu_custom_call.1} parent=0 // pred_check
    _
  $region19: #{tpu_custom_call.1} parent=0 // pred_check_branch
    %24 = sbr.rel (0) target = $region21
  $region20: #{tpu_custom_call.1} parent=0 // pred_region
    _
  $region21: #{tpu_custom_call.1} parent=0 // pred_fallthru
    _
  // Predicated region
  $region22: #{tpu_custom_call.1} parent=0 // pred_check
    _
  $region23: #{tpu_custom_call.1} parent=0 // pred_check_branch
    %26 = sbr.rel (0) target = $region25
  $region24: #{tpu_custom_call.1} parent=0 // pred_region
    _
  $region25: #{tpu_custom_call.1} parent=0 // pred_fallthru
    _
  // Predicated region
  $region26: #{tpu_custom_call.1} parent=0 // pred_check
    _
  $region27: #{tpu_custom_call.1} parent=0 // pred_check_branch
    %28 = sbr.rel (0) target = $region29
  $region28: #{tpu_custom_call.1} parent=0 // pred_region
    _
  $region29: #{tpu_custom_call.1} parent=0 // pred_fallthru
    _
  // Predicated region
  $region30: #{tpu_custom_call.1} parent=0 // pred_check
    _
  $region31: #{tpu_custom_call.1} parent=0 // pred_check_branch
    %30 = sbr.rel (0) target = $region33
  $region32: #{tpu_custom_call.1} parent=0 // pred_region
    _
  $region33: #{tpu_custom_call.1} parent=0 // pred_fallthru
    _
  // Predicated region
  $region34: #{tpu_custom_call.1} parent=0 // pred_check
    _
  $region35: #{tpu_custom_call.1} parent=0 // pred_check_branch
    %32 = sbr.rel (0) target = $region37
  $region36: #{tpu_custom_call.1} parent=0 // pred_region
    _
  $region37: #{tpu_custom_call.1} parent=0 // pred_fallthru
    _
  %v34 = vld [vmem:[%s0] sm:$0xff]
  %v35 = vld [vmem:[%s0 + $0x8] sm:$0xff]
  %v36 = vld [vmem:[%s0 + $0x10] sm:$0xff]
  %v37 = vld [vmem:[%s0 + $0x18] sm:$0xff]
  %v38 = vld [vmem:[%s0 + $0x20] sm:$0xff]
  %v39 = vld [vmem:[%s0 + $0x28] sm:$0xff]
  %v40 = vld [vmem:[%s0 + $0x30] sm:$0xff]
  %v41 = vld [vmem:[%s0 + $0x38] sm:$0xff]
  %v42 = vld [vmem:[%s0 + $0x40] sm:$0xff]
  %v43 = vld [vmem:[%s0 + $0x48] sm:$0xff]
  %v44 = vld [vmem:[%s0 + $0x50] sm:$0xff]
  %v45 = vld [vmem:[%s0 + $0x58] sm:$0xff]
  %v46 = vld [vmem:[%s0 + $0x60] sm:$0xff]
  %v47 = vld [vmem:[%s0 + $0x68] sm:$0xff]
  %v48 = vld [vmem:[%s0 + $0x70] sm:$0xff]
  %v49 = vld [vmem:[%s0 + $0x78] sm:$0xff]
  %v50 = vld [vmem:[%s0 + $0x80] sm:$0xff]
  %v51 = vld [vmem:[%s0 + $0x88] sm:$0xff]
  %v52 = vld [vmem:[%s0 + $0x90] sm:$0xff]
  %v53 = vld [vmem:[%s0 + $0x98] sm:$0xff]
  %v54 = vld [vmem:[%s0 + $0xa0] sm:$0xff]
  %v55 = vld [vmem:[%s0 + $0xa8] sm:$0xff]
  %v56 = vld [vmem:[%s0 + $0xb0] sm:$0xff]
  %v57 = vld [vmem:[%s0 + $0xb8] sm:$0xff]
  %v58 = vld [vmem:[%s0 + $0xc0] sm:$0xff]
  %v59 = vld [vmem:[%s0 + $0xc8] sm:$0xff]
  %v60 = vld [vmem:[%s0 + $0xd0] sm:$0xff]
  %v61 = vld [vmem:[%s0 + $0xd8] sm:$0xff]
  %v62 = vld [vmem:[%s0 + $0xe0] sm:$0xff]
  %v63 = vld [vmem:[%s0 + $0xe8] sm:$0xff]
  %v64 = vld [vmem:[%s0 + $0xf0] sm:$0xff]
  %v65 = vld [vmem:[%s0 + $0xf8] sm:$0xff]
  %v66 = vpack.c.bf16 %v35, %v34
  %v67 = vpack.c.bf16 %v37, %v36
  %v68 = vpack.c.bf16 %v39, %v38
  %v69 = vpack.c.bf16 %v41, %v40
  %v70 = vpack.c.bf16 %v43, %v42
  %v71 = vpack.c.bf16 %v45, %v44
  %v72 = vpack.c.bf16 %v47, %v46
  %v73 = vpack.c.bf16 %v49, %v48
  %v74 = vpack.c.bf16 %v51, %v50
  %v75 = vpack.c.bf16 %v53, %v52
  %v76 = vpack.c.bf16 %v55, %v54
  %v77 = vpack.c.bf16 %v57, %v56
  %v78 = vpack.c.bf16 %v59, %v58
  %v79 = vpack.c.bf16 %v61, %v60
  %v80 = vpack.c.bf16 %v63, %v62
  %v81 = vpack.c.bf16 %v65, %v64
  %v82 = vld [vmem:[%s1] sm:$0xff]
  %v83 = vld [vmem:[%s1 + $0x8] sm:$0xff]
  %v84 = vld [vmem:[%s1 + $0x10] sm:$0xff]
  %v85 = vld [vmem:[%s1 + $0x18] sm:$0xff]
  %v86 = vld [vmem:[%s1 + $0x20] sm:$0xff]
  %v87 = vld [vmem:[%s1 + $0x28] sm:$0xff]
  %v88 = vld [vmem:[%s1 + $0x30] sm:$0xff]
  %v89 = vld [vmem:[%s1 + $0x38] sm:$0xff]
  %v90 = vld [vmem:[%s1 + $0x40] sm:$0xff]
  %v91 = vld [vmem:[%s1 + $0x48] sm:$0xff]
  %v92 = vld [vmem:[%s1 + $0x50] sm:$0xff]
  %v93 = vld [vmem:[%s1 + $0x58] sm:$0xff]
  %v94 = vld [vmem:[%s1 + $0x60] sm:$0xff]
  %v95 = vld [vmem:[%s1 + $0x68] sm:$0xff]
  %v96 = vld [vmem:[%s1 + $0x70] sm:$0xff]
  %v97 = vld [vmem:[%s1 + $0x78] sm:$0xff]
  %v98 = vld [vmem:[%s1 + $0x80] sm:$0xff]
  %v99 = vld [vmem:[%s1 + $0x88] sm:$0xff]
  %v100 = vld [vmem:[%s1 + $0x90] sm:$0xff]
  %v101 = vld [vmem:[%s1 + $0x98] sm:$0xff]
  %v102 = vld [vmem:[%s1 + $0xa0] sm:$0xff]
  %v103 = vld [vmem:[%s1 + $0xa8] sm:$0xff]
  %v104 = vld [vmem:[%s1 + $0xb0] sm:$0xff]
  %v105 = vld [vmem:[%s1 + $0xb8] sm:$0xff]
  %v106 = vld [vmem:[%s1 + $0xc0] sm:$0xff]
  %v107 = vld [vmem:[%s1 + $0xc8] sm:$0xff]
  %v108 = vld [vmem:[%s1 + $0xd0] sm:$0xff]
  %v109 = vld [vmem:[%s1 + $0xd8] sm:$0xff]
  %v110 = vld [vmem:[%s1 + $0xe0] sm:$0xff]
  %v111 = vld [vmem:[%s1 + $0xe8] sm:$0xff]
  %v112 = vld [vmem:[%s1 + $0xf0] sm:$0xff]
  %v113 = vld [vmem:[%s1 + $0xf8] sm:$0xff]
  %v114 = vpack.c.bf16 %v83, %v82
  %v115 = vpack.c.bf16 %v85, %v84
  %v116 = vpack.c.bf16 %v87, %v86
  %v117 = vpack.c.bf16 %v89, %v88
  %v118 = vpack.c.bf16 %v91, %v90
  %v119 = vpack.c.bf16 %v93, %v92
  %v120 = vpack.c.bf16 %v95, %v94
  %v121 = vpack.c.bf16 %v97, %v96
  %v122 = vpack.c.bf16 %v99, %v98
  %v123 = vpack.c.bf16 %v101, %v100
  %v124 = vpack.c.bf16 %v103, %v102
  %v125 = vpack.c.bf16 %v105, %v104
  %v126 = vpack.c.bf16 %v107, %v106
  %v127 = vpack.c.bf16 %v109, %v108
  %v128 = vpack.c.bf16 %v111, %v110
  %v129 = vpack.c.bf16 %v113, %v112
  %v130 = vld [vmem:[%s2] sm:$0xff]
  %v131 = vld [vmem:[%s2 + $0x8] sm:$0xff]
  %v132 = vld [vmem:[%s3] sm:$0xff]
  %v134 = vunpack.c.l.b16 %v132
  %v135 = vunpack.c.h.b16 %v132
  %v136 = vpack.c.b16 %v134, %v134
  %v137 = vpack.c.b16 %v135, %v135
  %vm138 = vcmask 64512
  %v140 = vsel %vm138, %v114, 0
  %v143 = vsel %vm138, %v115, 0
  %v146 = vsel %vm138, %v116, 0
  %v149 = vsel %vm138, %v117, 0
  %v152 = vsel %vm138, %v118, 0
  %v155 = vsel %vm138, %v119, 0
  %v158 = vsel %vm138, %v120, 0
  %v161 = vsel %vm138, %v121, 0
  %v164 = vsel %vm138, %v122, 0
  %v167 = vsel %vm138, %v123, 0
  %v170 = vsel %vm138, %v124, 0
  %v173 = vsel %vm138, %v125, 0
  %v176 = vsel %vm138, %v126, 0
  %v179 = vsel %vm138, %v127, 0
  %v182 = vsel %vm138, %v128, 0
  %v185 = vsel %vm138, %v129, 0
  %vm187 = vcmask 1043456
  %v189 = vsel %vm187, %v136, 0
  %v192 = vsel %vm187, %v137, 0
  %194 = vmatprep.subr.bf16.mxu0 %v192
  %195 = vmatpush1.bf16.msra.mxu0 %v189
  %196 = vmatprep.subr.bf16.mxu0 0
  %197 = vmatpush1.bf16.msra.mxu0 0
  %198 = vmatprep.subr.bf16.mxu0 0
  %199 = vmatpush1.bf16.msra.mxu0 0
  %200 = vmatprep.subr.bf16.mxu0 0
  %201 = vmatpush1.bf16.msra.mxu0 0
  %202 = vmatprep.subr.bf16.mxu0 0
  %203 = vmatpush1.bf16.msra.mxu0 0
  %204 = vmatprep.subr.bf16.mxu0 0
  %205 = vmatpush1.bf16.msra.mxu0 0
  %206 = vmatprep.subr.bf16.mxu0 0
  %207 = vmatpush1.bf16.msra.mxu0 0
  %208 = vmatprep.subr.bf16.mxu0 0
  %209 = vmatpush1.bf16.msra.mxu0 0
  %210 = vmatprep.subr.bf16.mxu0 0
  %211 = vmatpush1.bf16.msra.mxu0 0
  %212 = vmatprep.subr.bf16.mxu0 0
  %213 = vmatpush1.bf16.msra.mxu0 0
  %214 = vmatprep.subr.bf16.mxu0 0
  %215 = vmatpush1.bf16.msra.mxu0 0
  %216 = vmatprep.subr.bf16.mxu0 0
  %217 = vmatpush1.bf16.msra.mxu0 0
  %218 = vmatprep.subr.bf16.mxu0 0
  %219 = vmatpush1.bf16.msra.mxu0 0
  %220 = vmatprep.subr.bf16.mxu0 0
  %221 = vmatpush1.bf16.msra.mxu0 0
  %222 = vmatprep.subr.bf16.mxu0 0
  %223 = vmatpush1.bf16.msra.mxu0 0
  %224 = vmatprep.subr.bf16.mxu0 0
  %225 = vmatpush1.bf16.msra.mxu0 0
  %226 = vmatprep.mubr.bf16.mxu0 0
  %227 = vmatmul.mubr.bf16.gmra.mrb[0].mxu0 %v140
  %v228 = vpop.f32.mrb[0].mxu0
  %v229 = vadd.f32 0.0, %v228
  %v230 = vpop.f32.mrb[0].mxu0
  %v231 = vadd.f32 0.0, %v230
  %v232 = vpop.f32.mrb[0].mxu0
  %v233 = vadd.f32 0.0, %v232
  %v234 = vpop.f32.mrb[0].mxu0
  %v235 = vadd.f32 0.0, %v234
  %236 = vmatprep.mubr.bf16.mxu0 0
  %237 = vmatmul.mubr.bf16.gmra.mrb[0].mxu0 %v143
  %v238 = vpop.f32.mrb[0].mxu0
  %v239 = vadd.f32 0.0, %v238
  %v240 = vpop.f32.mrb[0].mxu0
  %v241 = vadd.f32 0.0, %v240
  %v242 = vpop.f32.mrb[0].mxu0
  %v243 = vadd.f32 0.0, %v242
  %v244 = vpop.f32.mrb[0].mxu0
  %v245 = vadd.f32 0.0, %v244
  %246 = vmatprep.mubr.bf16.mxu0 0
  %247 = vmatmul.mubr.bf16.gmra.mrb[0].mxu0 %v146
  %v248 = vpop.f32.mrb[0].mxu0
  %v249 = vadd.f32 0.0, %v248
  %v250 = vpop.f32.mrb[0].mxu0
  %v251 = vadd.f32 0.0, %v250
  %v252 = vpop.f32.mrb[0].mxu0
  %v253 = vadd.f32 0.0, %v252
  %v254 = vpop.f32.mrb[0].mxu0
  %v255 = vadd.f32 0.0, %v254
  %256 = vmatprep.mubr.bf16.mxu0 0
  %257 = vmatmul.mubr.bf16.gmra.mrb[0].mxu0 %v149
  %v258 = vpop.f32.mrb[0].mxu0
  %v259 = vadd.f32 0.0, %v258
  %v260 = vpop.f32.mrb[0].mxu0
  %v261 = vadd.f32 0.0, %v260
  %v262 = vpop.f32.mrb[0].mxu0
  %v263 = vadd.f32 0.0, %v262
  %v264 = vpop.f32.mrb[0].mxu0
  %v265 = vadd.f32 0.0, %v264
  %266 = vmatprep.mubr.bf16.mxu0 0
  %267 = vmatmul.mubr.bf16.gmra.mrb[0].mxu0 %v152
  %v268 = vpop.f32.mrb[0].mxu0
  %v269 = vadd.f32 0.0, %v268
  %v270 = vpop.f32.mrb[0].mxu0
  %v271 = vadd.f32 0.0, %v270
  %v272 = vpop.f32.mrb[0].mxu0
  %v273 = vadd.f32 0.0, %v272
  %v274 = vpop.f32.mrb[0].mxu0
  %v275 = vadd.f32 0.0, %v274
  %276 = vmatprep.mubr.bf16.mxu0 0
  %277 = vmatmul.mubr.bf16.gmra.mrb[0].mxu0 %v155
  %v278 = vpop.f32.mrb[0].mxu0
  %v279 = vadd.f32 0.0, %v278
  %v280 = vpop.f32.mrb[0].mxu0
  %v281 = vadd.f32 0.0, %v280
  %v282 = vpop.f32.mrb[0].mxu0
  %v283 = vadd.f32 0.0, %v282
  %v284 = vpop.f32.mrb[0].mxu0
  %v285 = vadd.f32 0.0, %v284
  %286 = vmatprep.mubr.bf16.mxu0 0
  %287 = vmatmul.mubr.bf16.gmra.mrb[0].mxu0 %v158
  %v288 = vpop.f32.mrb[0].mxu0
  %v289 = vadd.f32 0.0, %v288
  %v290 = vpop.f32.mrb[0].mxu0
  %v291 = vadd.f32 0.0, %v290
  %v292 = vpop.f32.mrb[0].mxu0
  %v293 = vadd.f32 0.0, %v292
  %v294 = vpop.f32.mrb[0].mxu0
  %v295 = vadd.f32 0.0, %v294
  %296 = vmatprep.mubr.bf16.mxu0 0
  %297 = vmatmul.mubr.bf16.gmra.mrb[0].mxu0 %v161
  %v298 = vpop.f32.mrb[0].mxu0
  %v299 = vadd.f32 0.0, %v298
  %v300 = vpop.f32.mrb[0].mxu0
  %v301 = vadd.f32 0.0, %v300
  %v302 = vpop.f32.mrb[0].mxu0
  %v303 = vadd.f32 0.0, %v302
  %v304 = vpop.f32.mrb[0].mxu0
  %v305 = vadd.f32 0.0, %v304
  %306 = vmatprep.mubr.bf16.mxu0 0
  %307 = vmatmul.mubr.bf16.gmra.mrb[0].mxu0 %v164
  %v308 = vpop.f32.mrb[0].mxu0
  %v309 = vadd.f32 0.0, %v308
  %v310 = vpop.f32.mrb[0].mxu0
  %v311 = vadd.f32 0.0, %v310
  %v312 = vpop.f32.mrb[0].mxu0
  %v313 = vadd.f32 0.0, %v312
  %v314 = vpop.f32.mrb[0].mxu0
  %v315 = vadd.f32 0.0, %v314
  %316 = vmatprep.mubr.bf16.mxu0 0
  %317 = vmatmul.mubr.bf16.gmra.mrb[0].mxu0 %v167
  %v318 = vpop.f32.mrb[0].mxu0
  %v319 = vadd.f32 0.0, %v318
  %v320 = vpop.f32.mrb[0].mxu0
  %v321 = vadd.f32 0.0, %v320
  %v322 = vpop.f32.mrb[0].mxu0
  %v323 = vadd.f32 0.0, %v322
  %v324 = vpop.f32.mrb[0].mxu0
  %v325 = vadd.f32 0.0, %v324
  %326 = vmatprep.mubr.bf16.mxu0 0
  %327 = vmatmul.mubr.bf16.gmra.mrb[0].mxu0 %v170
  %v328 = vpop.f32.mrb[0].mxu0
  %v329 = vadd.f32 0.0, %v328
  %v330 = vpop.f32.mrb[0].mxu0
  %v331 = vadd.f32 0.0, %v330
  %v332 = vpop.f32.mrb[0].mxu0
  %v333 = vadd.f32 0.0, %v332
  %v334 = vpop.f32.mrb[0].mxu0
  %v335 = vadd.f32 0.0, %v334
  %336 = vmatprep.mubr.bf16.mxu0 0
  %337 = vmatmul.mubr.bf16.gmra.mrb[0].mxu0 %v173
  %v338 = vpop.f32.mrb[0].mxu0
  %v339 = vadd.f32 0.0, %v338
  %v340 = vpop.f32.mrb[0].mxu0
  %v341 = vadd.f32 0.0, %v340
  %v342 = vpop.f32.mrb[0].mxu0
  %v343 = vadd.f32 0.0, %v342
  %v344 = vpop.f32.mrb[0].mxu0
  %v345 = vadd.f32 0.0, %v344
  %346 = vmatprep.mubr.bf16.mxu0 0
  %347 = vmatmul.mubr.bf16.gmra.mrb[0].mxu0 %v176
  %v348 = vpop.f32.mrb[0].mxu0
  %v349 = vadd.f32 0.0, %v348
  %v350 = vpop.f32.mrb[0].mxu0
  %v351 = vadd.f32 0.0, %v350
  %v352 = vpop.f32.mrb[0].mxu0
  %v353 = vadd.f32 0.0, %v352
  %v354 = vpop.f32.mrb[0].mxu0
  %v355 = vadd.f32 0.0, %v354
  %356 = vmatprep.mubr.bf16.mxu0 0
  %357 = vmatmul.mubr.bf16.gmra.mrb[0].mxu0 %v179
  %v358 = vpop.f32.mrb[0].mxu0
  %v359 = vadd.f32 0.0, %v358
  %v360 = vpop.f32.mrb[0].mxu0
  %v361 = vadd.f32 0.0, %v360
  %v362 = vpop.f32.mrb[0].mxu0
  %v363 = vadd.f32 0.0, %v362
  %v364 = vpop.f32.mrb[0].mxu0
  %v365 = vadd.f32 0.0, %v364
  %366 = vmatprep.mubr.bf16.mxu0 0
  %367 = vmatmul.mubr.bf16.gmra.mrb[0].mxu0 %v182
  %v368 = vpop.f32.mrb[0].mxu0
  %v369 = vadd.f32 0.0, %v368
  %v370 = vpop.f32.mrb[0].mxu0
  %v371 = vadd.f32 0.0, %v370
  %v372 = vpop.f32.mrb[0].mxu0
  %v373 = vadd.f32 0.0, %v372
  %v374 = vpop.f32.mrb[0].mxu0
  %v375 = vadd.f32 0.0, %v374
  %376 = vmatprep.mubr.bf16.mxu0 0
  %377 = vmatmul.mubr.bf16.gmra.mrb[0].mxu0 %v185
  %v378 = vpop.f32.mrb[0].mxu0
  %v379 = vadd.f32 0.0, %v378
  %v380 = vpop.f32.mrb[0].mxu0
  %v381 = vadd.f32 0.0, %v380
  %v382 = vpop.f32.mrb[0].mxu0
  %v383 = vadd.f32 0.0, %v382
  %v384 = vpop.f32.mrb[0].mxu0
  %v385 = vadd.f32 0.0, %v384
  %386 = vdwg.mxu0
  %v389 = vunpack.c.l.b16 %v130
  %v390 = vunpack.c.h.b16 %v130
  %v391 = vunpack.c.l.b16 %v131
  %v392 = vunpack.c.h.b16 %v131
  %v393 = vpack.c.b16 %v391, %v389
  %v394 = vpack.c.b16 %v392, %v390
  %vm397 = vcmask 130048
  %v399 = vsel %vm397, %v66, 0
  %v402 = vsel %vm397, %v67, 0
  %v405 = vsel %vm397, %v68, 0
  %v408 = vsel %vm397, %v69, 0
  %v411 = vsel %vm397, %v70, 0
  %v414 = vsel %vm397, %v71, 0
  %v417 = vsel %vm397, %v72, 0
  %v420 = vsel %vm397, %v73, 0
  %v423 = vsel %vm397, %v74, 0
  %v426 = vsel %vm397, %v75, 0
  %v429 = vsel %vm397, %v76, 0
  %v432 = vsel %vm397, %v77, 0
  %v435 = vsel %vm397, %v78, 0
  %v438 = vsel %vm397, %v79, 0
  %v441 = vsel %vm397, %v80, 0
  %v444 = vsel %vm397, %v81, 0
  %446 = vmatprep.subr.bf16.mxu0 %v394
  %447 = vmatpush1.bf16.msra.mxu0 %v393
  %448 = vmatprep.subr.bf16.mxu0 0
  %449 = vmatpush1.bf16.msra.mxu0 0
  %450 = vmatprep.subr.bf16.mxu0 0
  %451 = vmatpush1.bf16.msra.mxu0 0
  %452 = vmatprep.subr.bf16.mxu0 0
  %453 = vmatpush1.bf16.msra.mxu0 0
  %454 = vmatprep.subr.bf16.mxu0 0
  %455 = vmatpush1.bf16.msra.mxu0 0
  %456 = vmatprep.subr.bf16.mxu0 0
  %457 = vmatpush1.bf16.msra.mxu0 0
  %458 = vmatprep.subr.bf16.mxu0 0
  %459 = vmatpush1.bf16.msra.mxu0 0
  %460 = vmatprep.subr.bf16.mxu0 0
  %461 = vmatpush1.bf16.msra.mxu0 0
  %462 = vmatprep.subr.bf16.mxu0 0
  %463 = vmatpush1.bf16.msra.mxu0 0
  %464 = vmatprep.subr.bf16.mxu0 0
  %465 = vmatpush1.bf16.msra.mxu0 0
  %466 = vmatprep.subr.bf16.mxu0 0
  %467 = vmatpush1.bf16.msra.mxu0 0
  %468 = vmatprep.subr.bf16.mxu0 0
  %469 = vmatpush1.bf16.msra.mxu0 0
  %470 = vmatprep.subr.bf16.mxu0 0
  %471 = vmatpush1.bf16.msra.mxu0 0
  %472 = vmatprep.subr.bf16.mxu0 0
  %473 = vmatpush1.bf16.msra.mxu0 0
  %474 = vmatprep.subr.bf16.mxu0 0
  %475 = vmatpush1.bf16.msra.mxu0 0
  %476 = vmatprep.subr.bf16.mxu0 0
  %477 = vmatpush1.bf16.msra.mxu0 0
  %478 = vmatprep.mubr.bf16.mxu0 0
  %479 = vmatmul.mubr.bf16.gmra.mrb[0].mxu0 %v399
  %v480 = vpop.f32.mrb[0].mxu0
  %v481 = vadd.f32 %v229, %v480
  %v482 = vpop.f32.mrb[0].mxu0
  %v483 = vadd.f32 %v231, %v482
  %v484 = vpop.f32.mrb[0].mxu0
  %v485 = vadd.f32 %v233, %v484
  %v486 = vpop.f32.mrb[0].mxu0
  %v487 = vadd.f32 %v235, %v486
  %488 = vmatprep.mubr.bf16.mxu0 0
  %489 = vmatmul.mubr.bf16.gmra.mrb[0].mxu0 %v402
  %v490 = vpop.f32.mrb[0].mxu0
  %v491 = vadd.f32 %v239, %v490
  %v492 = vpop.f32.mrb[0].mxu0
  %v493 = vadd.f32 %v241, %v492
  %v494 = vpop.f32.mrb[0].mxu0
  %v495 = vadd.f32 %v243, %v494
  %v496 = vpop.f32.mrb[0].mxu0
  %v497 = vadd.f32 %v245, %v496
  %498 = vmatprep.mubr.bf16.mxu0 0
  %499 = vmatmul.mubr.bf16.gmra.mrb[0].mxu0 %v405
  %v500 = vpop.f32.mrb[0].mxu0
  %v501 = vadd.f32 %v249, %v500
  %v502 = vpop.f32.mrb[0].mxu0
  %v503 = vadd.f32 %v251, %v502
  %v504 = vpop.f32.mrb[0].mxu0
  %v505 = vadd.f32 %v253, %v504
  %v506 = vpop.f32.mrb[0].mxu0
  %v507 = vadd.f32 %v255, %v506
  %508 = vmatprep.mubr.bf16.mxu0 0
  %509 = vmatmul.mubr.bf16.gmra.mrb[0].mxu0 %v408
  %v510 = vpop.f32.mrb[0].mxu0
  %v511 = vadd.f32 %v259, %v510
  %v512 = vpop.f32.mrb[0].mxu0
  %v513 = vadd.f32 %v261, %v512
  %v514 = vpop.f32.mrb[0].mxu0
  %v515 = vadd.f32 %v263, %v514
  %v516 = vpop.f32.mrb[0].mxu0
  %v517 = vadd.f32 %v265, %v516
  %518 = vmatprep.mubr.bf16.mxu0 0
  %519 = vmatmul.mubr.bf16.gmra.mrb[0].mxu0 %v411
  %v520 = vpop.f32.mrb[0].mxu0
  %v521 = vadd.f32 %v269, %v520
  %v522 = vpop.f32.mrb[0].mxu0
  %v523 = vadd.f32 %v271, %v522
  %v524 = vpop.f32.mrb[0].mxu0
  %v525 = vadd.f32 %v273, %v524
  %v526 = vpop.f32.mrb[0].mxu0
  %v527 = vadd.f32 %v275, %v526
  %528 = vmatprep.mubr.bf16.mxu0 0
  %529 = vmatmul.mubr.bf16.gmra.mrb[0].mxu0 %v414
  %v530 = vpop.f32.mrb[0].mxu0
  %v531 = vadd.f32 %v279, %v530
  %v532 = vpop.f32.mrb[0].mxu0
  %v533 = vadd.f32 %v281, %v532
  %v534 = vpop.f32.mrb[0].mxu0
  %v535 = vadd.f32 %v283, %v534
  %v536 = vpop.f32.mrb[0].mxu0
  %v537 = vadd.f32 %v285, %v536
  %538 = vmatprep.mubr.bf16.mxu0 0
  %539 = vmatmul.mubr.bf16.gmra.mrb[0].mxu0 %v417
  %v540 = vpop.f32.mrb[0].mxu0
  %v541 = vadd.f32 %v289, %v540
  %v542 = vpop.f32.mrb[0].mxu0
  %v543 = vadd.f32 %v291, %v542
  %v544 = vpop.f32.mrb[0].mxu0
  %v545 = vadd.f32 %v293, %v544
  %v546 = vpop.f32.mrb[0].mxu0
  %v547 = vadd.f32 %v295, %v546
  %548 = vmatprep.mubr.bf16.mxu0 0
  %549 = vmatmul.mubr.bf16.gmra.mrb[0].mxu0 %v420
  %v550 = vpop.f32.mrb[0].mxu0
  %v551 = vadd.f32 %v299, %v550
  %v552 = vpop.f32.mrb[0].mxu0
  %v553 = vadd.f32 %v301, %v552
  %v554 = vpop.f32.mrb[0].mxu0
  %v555 = vadd.f32 %v303, %v554
  %v556 = vpop.f32.mrb[0].mxu0
  %v557 = vadd.f32 %v305, %v556
  %558 = vmatprep.mubr.bf16.mxu0 0
  %559 = vmatmul.mubr.bf16.gmra.mrb[0].mxu0 %v423
  %v560 = vpop.f32.mrb[0].mxu0
  %v561 = vadd.f32 %v309, %v560
  %v562 = vpop.f32.mrb[0].mxu0
  %v563 = vadd.f32 %v311, %v562
  %v564 = vpop.f32.mrb[0].mxu0
  %v565 = vadd.f32 %v313, %v564
  %v566 = vpop.f32.mrb[0].mxu0
  %v567 = vadd.f32 %v315, %v566
  %568 = vmatprep.mubr.bf16.mxu0 0
  %569 = vmatmul.mubr.bf16.gmra.mrb[0].mxu0 %v426
  %v570 = vpop.f32.mrb[0].mxu0
  %v571 = vadd.f32 %v319, %v570
  %v572 = vpop.f32.mrb[0].mxu0
  %v573 = vadd.f32 %v321, %v572
  %v574 = vpop.f32.mrb[0].mxu0
  %v575 = vadd.f32 %v323, %v574
  %v576 = vpop.f32.mrb[0].mxu0
  %v577 = vadd.f32 %v325, %v576
  %578 = vmatprep.mubr.bf16.mxu0 0
  %579 = vmatmul.mubr.bf16.gmra.mrb[0].mxu0 %v429
  %v580 = vpop.f32.mrb[0].mxu0
  %v581 = vadd.f32 %v329, %v580
  %v582 = vpop.f32.mrb[0].mxu0
  %v583 = vadd.f32 %v331, %v582
  %v584 = vpop.f32.mrb[0].mxu0
  %v585 = vadd.f32 %v333, %v584
  %v586 = vpop.f32.mrb[0].mxu0
  %v587 = vadd.f32 %v335, %v586
  %588 = vmatprep.mubr.bf16.mxu0 0
  %589 = vmatmul.mubr.bf16.gmra.mrb[0].mxu0 %v432
  %v590 = vpop.f32.mrb[0].mxu0
  %v591 = vadd.f32 %v339, %v590
  %v592 = vpop.f32.mrb[0].mxu0
  %v593 = vadd.f32 %v341, %v592
  %v594 = vpop.f32.mrb[0].mxu0
  %v595 = vadd.f32 %v343, %v594
  %v596 = vpop.f32.mrb[0].mxu0
  %v597 = vadd.f32 %v345, %v596
  %598 = vmatprep.mubr.bf16.mxu0 0
  %599 = vmatmul.mubr.bf16.gmra.mrb[0].mxu0 %v435
  %v600 = vpop.f32.mrb[0].mxu0
  %v601 = vadd.f32 %v349, %v600
  %v602 = vpop.f32.mrb[0].mxu0
  %v603 = vadd.f32 %v351, %v602
  %v604 = vpop.f32.mrb[0].mxu0
  %v605 = vadd.f32 %v353, %v604
  %v606 = vpop.f32.mrb[0].mxu0
  %v607 = vadd.f32 %v355, %v606
  %608 = vmatprep.mubr.bf16.mxu0 0
  %609 = vmatmul.mubr.bf16.gmra.mrb[0].mxu0 %v438
  %v610 = vpop.f32.mrb[0].mxu0
  %v611 = vadd.f32 %v359, %v610
  %v612 = vpop.f32.mrb[0].mxu0
  %v613 = vadd.f32 %v361, %v612
  %v614 = vpop.f32.mrb[0].mxu0
  %v615 = vadd.f32 %v363, %v614
  %v616 = vpop.f32.mrb[0].mxu0
  %v617 = vadd.f32 %v365, %v616
  %618 = vmatprep.mubr.bf16.mxu0 0
  %619 = vmatmul.mubr.bf16.gmra.mrb[0].mxu0 %v441
  %v620 = vpop.f32.mrb[0].mxu0
  %v621 = vadd.f32 %v369, %v620
  %v622 = vpop.f32.mrb[0].mxu0
  %v623 = vadd.f32 %v371, %v622
  %v624 = vpop.f32.mrb[0].mxu0
  %v625 = vadd.f32 %v373, %v624
  %v626 = vpop.f32.mrb[0].mxu0
  %v627 = vadd.f32 %v375, %v626
  %628 = vmatprep.mubr.bf16.mxu0 0
  %629 = vmatmul.mubr.bf16.gmra.mrb[0].mxu0 %v444
  %v630 = vpop.f32.mrb[0].mxu0
  %v631 = vadd.f32 %v379, %v630
  %v632 = vpop.f32.mrb[0].mxu0
  %v633 = vadd.f32 %v381, %v632
  %v634 = vpop.f32.mrb[0].mxu0
  %v635 = vadd.f32 %v383, %v634
  %v636 = vpop.f32.mrb[0].mxu0
  %v637 = vadd.f32 %v385, %v636
  %638 = vdwg.mxu0
  %v639 = vld [vmem:[%s4] sm:$0x3]
  %v641 = vlaneseq
  %v642 = vshrl.u32 %v641, 7
  %v643 = vsub.s32 0, %v642
  %v644 = vrot.slane %v639, %v643
  %v645 = vlaneseq
  %v646 = vshrl.u32 %v645, 7
  %v647 = vsub.s32 1, %v646
  %v648 = vrot.slane %v639, %v647
  %v651 = vadd.f32 %v481, %v644
  %v652 = vadd.f32 %v483, %v648
  %v653 = vadd.f32 %v485, %v644
  %v654 = vadd.f32 %v487, %v648
  %v655 = vadd.f32 %v491, %v644
  %v656 = vadd.f32 %v493, %v648
  %v657 = vadd.f32 %v495, %v644
  %v658 = vadd.f32 %v497, %v648
  %v659 = vadd.f32 %v501, %v644
  %v660 = vadd.f32 %v503, %v648
  %v661 = vadd.f32 %v505, %v644
  %v662 = vadd.f32 %v507, %v648
  %v663 = vadd.f32 %v511, %v644
  %v664 = vadd.f32 %v513, %v648
  %v665 = vadd.f32 %v515, %v644
  %v666 = vadd.f32 %v517, %v648
  %v667 = vadd.f32 %v521, %v644
  %v668 = vadd.f32 %v523, %v648
  %v669 = vadd.f32 %v525, %v644
  %v670 = vadd.f32 %v527, %v648
  %v671 = vadd.f32 %v531, %v644
  %v672 = vadd.f32 %v533, %v648
  %v673 = vadd.f32 %v535, %v644
  %v674 = vadd.f32 %v537, %v648
  %v675 = vadd.f32 %v541, %v644
  %v676 = vadd.f32 %v543, %v648
  %v677 = vadd.f32 %v545, %v644
  %v678 = vadd.f32 %v547, %v648
  %v679 = vadd.f32 %v551, %v644
  %v680 = vadd.f32 %v553, %v648
  %v681 = vadd.f32 %v555, %v644
  %v682 = vadd.f32 %v557, %v648
  %v683 = vadd.f32 %v561, %v644
  %v684 = vadd.f32 %v563, %v648
  %v685 = vadd.f32 %v565, %v644
  %v686 = vadd.f32 %v567, %v648
  %v687 = vadd.f32 %v571, %v644
  %v688 = vadd.f32 %v573, %v648
  %v689 = vadd.f32 %v575, %v644
  %v690 = vadd.f32 %v577, %v648
  %v691 = vadd.f32 %v581, %v644
  %v692 = vadd.f32 %v583, %v648
  %v693 = vadd.f32 %v585, %v644
  %v694 = vadd.f32 %v587, %v648
  %v695 = vadd.f32 %v591, %v644
  %v696 = vadd.f32 %v593, %v648
  %v697 = vadd.f32 %v595, %v644
  %v698 = vadd.f32 %v597, %v648
  %v699 = vadd.f32 %v601, %v644
  %v700 = vadd.f32 %v603, %v648
  %v701 = vadd.f32 %v605, %v644
  %v702 = vadd.f32 %v607, %v648
  %v703 = vadd.f32 %v611, %v644
  %v704 = vadd.f32 %v613, %v648
  %v705 = vadd.f32 %v615, %v644
  %v706 = vadd.f32 %v617, %v648
  %v707 = vadd.f32 %v621, %v644
  %v708 = vadd.f32 %v623, %v648
  %v709 = vadd.f32 %v625, %v644
  %v710 = vadd.f32 %v627, %v648
  %v711 = vadd.f32 %v631, %v644
  %v712 = vadd.f32 %v633, %v648
  %v713 = vadd.f32 %v635, %v644
  %v714 = vadd.f32 %v637, %v648
  %v715 = vmax.f32 %v651, 0.0
  %v716 = vmax.f32 %v652, 0.0
  %v717 = vmax.f32 %v653, 0.0
  %v718 = vmax.f32 %v654, 0.0
  %v719 = vmax.f32 %v655, 0.0
  %v720 = vmax.f32 %v656, 0.0
  %v721 = vmax.f32 %v657, 0.0
  %v722 = vmax.f32 %v658, 0.0
  %v723 = vmax.f32 %v659, 0.0
  %v724 = vmax.f32 %v660, 0.0
  %v725 = vmax.f32 %v661, 0.0
  %v726 = vmax.f32 %v662, 0.0
  %v727 = vmax.f32 %v663, 0.0
  %v728 = vmax.f32 %v664, 0.0
  %v729 = vmax.f32 %v665, 0.0
  %v730 = vmax.f32 %v666, 0.0
  %v731 = vmax.f32 %v667, 0.0
  %v732 = vmax.f32 %v668, 0.0
  %v733 = vmax.f32 %v669, 0.0
  %v734 = vmax.f32 %v670, 0.0
  %v735 = vmax.f32 %v671, 0.0
  %v736 = vmax.f32 %v672, 0.0
  %v737 = vmax.f32 %v673, 0.0
  %v738 = vmax.f32 %v674, 0.0
  %v739 = vmax.f32 %v675, 0.0
  %v740 = vmax.f32 %v676, 0.0
  %v741 = vmax.f32 %v677, 0.0
  %v742 = vmax.f32 %v678, 0.0
  %v743 = vmax.f32 %v679, 0.0
  %v744 = vmax.f32 %v680, 0.0
  %v745 = vmax.f32 %v681, 0.0
  %v746 = vmax.f32 %v682, 0.0
  %v747 = vmax.f32 %v683, 0.0
  %v748 = vmax.f32 %v684, 0.0
  %v749 = vmax.f32 %v685, 0.0
  %v750 = vmax.f32 %v686, 0.0
  %v751 = vmax.f32 %v687, 0.0
  %v752 = vmax.f32 %v688, 0.0
  %v753 = vmax.f32 %v689, 0.0
  %v754 = vmax.f32 %v690, 0.0
  %v755 = vmax.f32 %v691, 0.0
  %v756 = vmax.f32 %v692, 0.0
  %v757 = vmax.f32 %v693, 0.0
  %v758 = vmax.f32 %v694, 0.0
  %v759 = vmax.f32 %v695, 0.0
  %v760 = vmax.f32 %v696, 0.0
  %v761 = vmax.f32 %v697, 0.0
  %v762 = vmax.f32 %v698, 0.0
  %v763 = vmax.f32 %v699, 0.0
  %v764 = vmax.f32 %v700, 0.0
  %v765 = vmax.f32 %v701, 0.0
  %v766 = vmax.f32 %v702, 0.0
  %v767 = vmax.f32 %v703, 0.0
  %v768 = vmax.f32 %v704, 0.0
  %v769 = vmax.f32 %v705, 0.0
  %v770 = vmax.f32 %v706, 0.0
  %v771 = vmax.f32 %v707, 0.0
  %v772 = vmax.f32 %v708, 0.0
  %v773 = vmax.f32 %v709, 0.0
  %v774 = vmax.f32 %v710, 0.0
  %v775 = vmax.f32 %v711, 0.0
  %v776 = vmax.f32 %v712, 0.0
  %v777 = vmax.f32 %v713, 0.0
  %v778 = vmax.f32 %v714, 0.0
  %v779 = vpack.c.bf16 %v717, %v715
  %v780 = vpack.c.bf16 %v718, %v716
  %v781 = vpack.c.bf16 %v721, %v719
  %v782 = vpack.c.bf16 %v722, %v720
  %v783 = vpack.c.bf16 %v725, %v723
  %v784 = vpack.c.bf16 %v726, %v724
  %v785 = vpack.c.bf16 %v729, %v727
  %v786 = vpack.c.bf16 %v730, %v728
  %v787 = vpack.c.bf16 %v733, %v731
  %v788 = vpack.c.bf16 %v734, %v732
  %v789 = vpack.c.bf16 %v737, %v735
  %v790 = vpack.c.bf16 %v738, %v736
  %v791 = vpack.c.bf16 %v741, %v739
  %v792 = vpack.c.bf16 %v742, %v740
  %v793 = vpack.c.bf16 %v745, %v743
  %v794 = vpack.c.bf16 %v746, %v744
  %v795 = vpack.c.bf16 %v749, %v747
  %v796 = vpack.c.bf16 %v750, %v748
  %v797 = vpack.c.bf16 %v753, %v751
  %v798 = vpack.c.bf16 %v754, %v752
  %v799 = vpack.c.bf16 %v757, %v755
  %v800 = vpack.c.bf16 %v758, %v756
  %v801 = vpack.c.bf16 %v761, %v759
  %v802 = vpack.c.bf16 %v762, %v760
  %v803 = vpack.c.bf16 %v765, %v763
  %v804 = vpack.c.bf16 %v766, %v764
  %v805 = vpack.c.bf16 %v769, %v767
  %v806 = vpack.c.bf16 %v770, %v768
  %v807 = vpack.c.bf16 %v773, %v771
  %v808 = vpack.c.bf16 %v774, %v772
  %v809 = vpack.c.bf16 %v777, %v775
  %v810 = vpack.c.bf16 %v778, %v776
  %v811 = vld [vmem:[%s5] sm:$0xff]
  %v812 = vld [vmem:[%s5 + $0x8] sm:$0xff]
  %v813 = vld [vmem:[%s5 + $0x10] sm:$0xff]
  %v814 = vld [vmem:[%s5 + $0x18] sm:$0xff]
  %v815 = vld [vmem:[%s5 + $0x20] sm:$0xff]
  %v816 = vld [vmem:[%s5 + $0x28] sm:$0xff]
  %v817 = vld [vmem:[%s5 + $0x30] sm:$0xff]
  %v818 = vld [vmem:[%s5 + $0x38] sm:$0xff]
  %v819 = vld [vmem:[%s5 + $0x40] sm:$0xff]
  %v820 = vld [vmem:[%s5 + $0x48] sm:$0xff]
  %v821 = vld [vmem:[%s5 + $0x50] sm:$0xff]
  %v822 = vld [vmem:[%s5 + $0x58] sm:$0xff]
  %v823 = vld [vmem:[%s5 + $0x60] sm:$0xff]
  %v824 = vld [vmem:[%s5 + $0x68] sm:$0xff]
  %v825 = vld [vmem:[%s5 + $0x70] sm:$0xff]
  %v826 = vld [vmem:[%s5 + $0x78] sm:$0xff]
  %v827 = vld [vmem:[%s5 + $0x80] sm:$0xff]
  %v828 = vld [vmem:[%s5 + $0x88] sm:$0xff]
  %v829 = vld [vmem:[%s5 + $0x90] sm:$0xff]
  %v830 = vld [vmem:[%s5 + $0x98] sm:$0xff]
  %v831 = vld [vmem:[%s5 + $0xa0] sm:$0xff]
  %v832 = vld [vmem:[%s5 + $0xa8] sm:$0xff]
  %v833 = vld [vmem:[%s5 + $0xb0] sm:$0xff]
  %v834 = vld [vmem:[%s5 + $0xb8] sm:$0xff]
  %v835 = vld [vmem:[%s5 + $0xc0] sm:$0xff]
  %v836 = vld [vmem:[%s5 + $0xc8] sm:$0xff]
  %v837 = vld [vmem:[%s5 + $0xd0] sm:$0xff]
  %v838 = vld [vmem:[%s5 + $0xd8] sm:$0xff]
  %v839 = vld [vmem:[%s5 + $0xe0] sm:$0xff]
  %v840 = vld [vmem:[%s5 + $0xe8] sm:$0xff]
  %v841 = vld [vmem:[%s5 + $0xf0] sm:$0xff]
  %v842 = vld [vmem:[%s5 + $0xf8] sm:$0xff]
  %v843 = vld [vmem:[%s6] sm:$0x3]
  %v845 = vlaneseq
  %v846 = vshrl.u32 %v845, 7
  %v847 = vsub.s32 0, %v846
  %v848 = vrot.slane %v843, %v847
  %v849 = vlaneseq
  %v850 = vshrl.u32 %v849, 7
  %v851 = vsub.s32 1, %v850
  %v852 = vrot.slane %v843, %v851
  %v887 = vunpack.c.l.b16 %v811
  %v888 = vunpack.c.h.b16 %v811
  %v889 = vunpack.c.l.b16 %v812
  %v890 = vunpack.c.h.b16 %v812
  %v891 = vunpack.c.l.b16 %v813
  %v892 = vunpack.c.h.b16 %v813
  %v893 = vunpack.c.l.b16 %v814
  %v894 = vunpack.c.h.b16 %v814
  %v895 = vunpack.c.l.b16 %v815
  %v896 = vunpack.c.h.b16 %v815
  %v897 = vunpack.c.l.b16 %v816
  %v898 = vunpack.c.h.b16 %v816
  %v899 = vunpack.c.l.b16 %v817
  %v900 = vunpack.c.h.b16 %v817
  %v901 = vunpack.c.l.b16 %v818
  %v902 = vunpack.c.h.b16 %v818
  %v903 = vunpack.c.l.b16 %v819
  %v904 = vunpack.c.h.b16 %v819
  %v905 = vunpack.c.l.b16 %v820
  %v906 = vunpack.c.h.b16 %v820
  %v907 = vunpack.c.l.b16 %v821
  %v908 = vunpack.c.h.b16 %v821
  %v909 = vunpack.c.l.b16 %v822
  %v910 = vunpack.c.h.b16 %v822
  %v911 = vunpack.c.l.b16 %v823
  %v912 = vunpack.c.h.b16 %v823
  %v913 = vunpack.c.l.b16 %v824
  %v914 = vunpack.c.h.b16 %v824
  %v915 = vunpack.c.l.b16 %v825
  %v916 = vunpack.c.h.b16 %v825
  %v917 = vunpack.c.l.b16 %v826
  %v918 = vunpack.c.h.b16 %v826
  %v919 = vunpack.c.l.b16 %v827
  %v920 = vunpack.c.h.b16 %v827
  %v921 = vunpack.c.l.b16 %v828
  %v922 = vunpack.c.h.b16 %v828
  %v923 = vunpack.c.l.b16 %v829
  %v924 = vunpack.c.h.b16 %v829
  %v925 = vunpack.c.l.b16 %v830
  %v926 = vunpack.c.h.b16 %v830
  %v927 = vunpack.c.l.b16 %v831
  %v928 = vunpack.c.h.b16 %v831
  %v929 = vunpack.c.l.b16 %v832
  %v930 = vunpack.c.h.b16 %v832
  %v931 = vunpack.c.l.b16 %v833
  %v932 = vunpack.c.h.b16 %v833
  %v933 = vunpack.c.l.b16 %v834
  %v934 = vunpack.c.h.b16 %v834
  %v935 = vunpack.c.l.b16 %v835
  %v936 = vunpack.c.h.b16 %v835
  %v937 = vunpack.c.l.b16 %v836
  %v938 = vunpack.c.h.b16 %v836
  %v939 = vunpack.c.l.b16 %v837
  %v940 = vunpack.c.h.b16 %v837
  %v941 = vunpack.c.l.b16 %v838
  %v942 = vunpack.c.h.b16 %v838
  %v943 = vunpack.c.l.b16 %v839
  %v944 = vunpack.c.h.b16 %v839
  %v945 = vunpack.c.l.b16 %v840
  %v946 = vunpack.c.h.b16 %v840
  %v947 = vunpack.c.l.b16 %v841
  %v948 = vunpack.c.h.b16 %v841
  %v949 = vunpack.c.l.b16 %v842
  %v950 = vunpack.c.h.b16 %v842
  %v951 = vpack.c.b16 %v889, %v887
  %v952 = vpack.c.b16 %v890, %v888
  %v953 = vpack.c.b16 %v893, %v891
  %v954 = vpack.c.b16 %v894, %v892
  %v955 = vpack.c.b16 %v897, %v895
  %v956 = vpack.c.b16 %v898, %v896
  %v957 = vpack.c.b16 %v901, %v899
  %v958 = vpack.c.b16 %v902, %v900
  %v959 = vpack.c.b16 %v905, %v903
  %v960 = vpack.c.b16 %v906, %v904
  %v961 = vpack.c.b16 %v909, %v907
  %v962 = vpack.c.b16 %v910, %v908
  %v963 = vpack.c.b16 %v913, %v911
  %v964 = vpack.c.b16 %v914, %v912
  %v965 = vpack.c.b16 %v917, %v915
  %v966 = vpack.c.b16 %v918, %v916
  %v967 = vpack.c.b16 %v921, %v919
  %v968 = vpack.c.b16 %v922, %v920
  %v969 = vpack.c.b16 %v925, %v923
  %v970 = vpack.c.b16 %v926, %v924
  %v971 = vpack.c.b16 %v929, %v927
  %v972 = vpack.c.b16 %v930, %v928
  %v973 = vpack.c.b16 %v933, %v931
  %v974 = vpack.c.b16 %v934, %v932
  %v975 = vpack.c.b16 %v937, %v935
  %v976 = vpack.c.b16 %v938, %v936
  %v977 = vpack.c.b16 %v941, %v939
  %v978 = vpack.c.b16 %v942, %v940
  %v979 = vpack.c.b16 %v945, %v943
  %v980 = vpack.c.b16 %v946, %v944
  %v981 = vpack.c.b16 %v949, %v947
  %v982 = vpack.c.b16 %v950, %v948
  %1015 = vmatprep.subr.bf16.mxu0 %v952
  %1016 = vmatpush1.bf16.msra.mxu0 %v951
  %1017 = vmatprep.subr.bf16.mxu0 %v954
  %1018 = vmatpush1.bf16.msra.mxu0 %v953
  %1019 = vmatprep.subr.bf16.mxu0 %v956
  %1020 = vmatpush1.bf16.msra.mxu0 %v955
  %1021 = vmatprep.subr.bf16.mxu0 %v958
  %1022 = vmatpush1.bf16.msra.mxu0 %v957
  %1023 = vmatprep.subr.bf16.mxu0 %v960
  %1024 = vmatpush1.bf16.msra.mxu0 %v959
  %1025 = vmatprep.subr.bf16.mxu0 %v962
  %1026 = vmatpush1.bf16.msra.mxu0 %v961
  %1027 = vmatprep.subr.bf16.mxu0 %v964
  %1028 = vmatpush1.bf16.msra.mxu0 %v963
  %1029 = vmatprep.subr.bf16.mxu0 %v966
  %1030 = vmatpush1.bf16.msra.mxu0 %v965
  %1031 = vmatprep.subr.bf16.mxu0 %v968
  %1032 = vmatpush1.bf16.msra.mxu0 %v967
  %1033 = vmatprep.subr.bf16.mxu0 %v970
  %1034 = vmatpush1.bf16.msra.mxu0 %v969
  %1035 = vmatprep.subr.bf16.mxu0 %v972
  %1036 = vmatpush1.bf16.msra.mxu0 %v971
  %1037 = vmatprep.subr.bf16.mxu0 %v974
  %1038 = vmatpush1.bf16.msra.mxu0 %v973
  %1039 = vmatprep.subr.bf16.mxu0 %v976
  %1040 = vmatpush1.bf16.msra.mxu0 %v975
  %1041 = vmatprep.subr.bf16.mxu0 %v978
  %1042 = vmatpush1.bf16.msra.mxu0 %v977
  %1043 = vmatprep.subr.bf16.mxu0 %v980
  %1044 = vmatpush1.bf16.msra.mxu0 %v979
  %1045 = vmatprep.subr.bf16.mxu0 %v982
  %1046 = vmatpush1.bf16.msra.mxu0 %v981
  %1047 = vmatprep.mubr.bf16.mxu0 %v780
  %1048 = vmatmul.mubr.bf16.gmra.mrb[0].mxu0 %v779
  %v1049 = vpop.f32.mrb[0].mxu0
  %v1050 = vadd.f32 %v848, %v1049
  %v1051 = vpop.f32.mrb[0].mxu0
  %v1052 = vadd.f32 %v852, %v1051
  %v1053 = vpop.f32.mrb[0].mxu0
  %v1054 = vadd.f32 %v848, %v1053
  %v1055 = vpop.f32.mrb[0].mxu0
  %v1056 = vadd.f32 %v852, %v1055
  %1057 = vmatprep.mubr.bf16.mxu0 %v782
  %1058 = vmatmul.mubr.bf16.gmra.mrb[0].mxu0 %v781
  %v1059 = vpop.f32.mrb[0].mxu0
  %v1060 = vadd.f32 %v848, %v1059
  %v1061 = vpop.f32.mrb[0].mxu0
  %v1062 = vadd.f32 %v852, %v1061
  %v1063 = vpop.f32.mrb[0].mxu0
  %v1064 = vadd.f32 %v848, %v1063
  %v1065 = vpop.f32.mrb[0].mxu0
  %v1066 = vadd.f32 %v852, %v1065
  %1067 = vmatprep.mubr.bf16.mxu0 %v784
  %1068 = vmatmul.mubr.bf16.gmra.mrb[0].mxu0 %v783
  %v1069 = vpop.f32.mrb[0].mxu0
  %v1070 = vadd.f32 %v848, %v1069
  %v1071 = vpop.f32.mrb[0].mxu0
  %v1072 = vadd.f32 %v852, %v1071
  %v1073 = vpop.f32.mrb[0].mxu0
  %v1074 = vadd.f32 %v848, %v1073
  %v1075 = vpop.f32.mrb[0].mxu0
  %v1076 = vadd.f32 %v852, %v1075
  %1077 = vmatprep.mubr.bf16.mxu0 %v786
  %1078 = vmatmul.mubr.bf16.gmra.mrb[0].mxu0 %v785
  %v1079 = vpop.f32.mrb[0].mxu0
  %v1080 = vadd.f32 %v848, %v1079
  %v1081 = vpop.f32.mrb[0].mxu0
  %v1082 = vadd.f32 %v852, %v1081
  %v1083 = vpop.f32.mrb[0].mxu0
  %v1084 = vadd.f32 %v848, %v1083
  %v1085 = vpop.f32.mrb[0].mxu0
  %v1086 = vadd.f32 %v852, %v1085
  %1087 = vmatprep.mubr.bf16.mxu0 %v788
  %1088 = vmatmul.mubr.bf16.gmra.mrb[0].mxu0 %v787
  %v1089 = vpop.f32.mrb[0].mxu0
  %v1090 = vadd.f32 %v848, %v1089
  %v1091 = vpop.f32.mrb[0].mxu0
  %v1092 = vadd.f32 %v852, %v1091
  %v1093 = vpop.f32.mrb[0].mxu0
  %v1094 = vadd.f32 %v848, %v1093
  %v1095 = vpop.f32.mrb[0].mxu0
  %v1096 = vadd.f32 %v852, %v1095
  %1097 = vmatprep.mubr.bf16.mxu0 %v790
  %1098 = vmatmul.mubr.bf16.gmra.mrb[0].mxu0 %v789
  %v1099 = vpop.f32.mrb[0].mxu0
  %v1100 = vadd.f32 %v848, %v1099
  %v1101 = vpop.f32.mrb[0].mxu0
  %v1102 = vadd.f32 %v852, %v1101
  %v1103 = vpop.f32.mrb[0].mxu0
  %v1104 = vadd.f32 %v848, %v1103
  %v1105 = vpop.f32.mrb[0].mxu0
  %v1106 = vadd.f32 %v852, %v1105
  %1107 = vmatprep.mubr.bf16.mxu0 %v792
  %1108 = vmatmul.mubr.bf16.gmra.mrb[0].mxu0 %v791
  %v1109 = vpop.f32.mrb[0].mxu0
  %v1110 = vadd.f32 %v848, %v1109
  %v1111 = vpop.f32.mrb[0].mxu0
  %v1112 = vadd.f32 %v852, %v1111
  %v1113 = vpop.f32.mrb[0].mxu0
  %v1114 = vadd.f32 %v848, %v1113
  %v1115 = vpop.f32.mrb[0].mxu0
  %v1116 = vadd.f32 %v852, %v1115
  %1117 = vmatprep.mubr.bf16.mxu0 %v794
  %1118 = vmatmul.mubr.bf16.gmra.mrb[0].mxu0 %v793
  %v1119 = vpop.f32.mrb[0].mxu0
  %v1120 = vadd.f32 %v848, %v1119
  %v1121 = vpop.f32.mrb[0].mxu0
  %v1122 = vadd.f32 %v852, %v1121
  %v1123 = vpop.f32.mrb[0].mxu0
  %v1124 = vadd.f32 %v848, %v1123
  %v1125 = vpop.f32.mrb[0].mxu0
  %v1126 = vadd.f32 %v852, %v1125
  %1127 = vmatprep.mubr.bf16.mxu0 %v796
  %1128 = vmatmul.mubr.bf16.gmra.mrb[0].mxu0 %v795
  %v1129 = vpop.f32.mrb[0].mxu0
  %v1130 = vadd.f32 %v848, %v1129
  %v1131 = vpop.f32.mrb[0].mxu0
  %v1132 = vadd.f32 %v852, %v1131
  %v1133 = vpop.f32.mrb[0].mxu0
  %v1134 = vadd.f32 %v848, %v1133
  %v1135 = vpop.f32.mrb[0].mxu0
  %v1136 = vadd.f32 %v852, %v1135
  %1137 = vmatprep.mubr.bf16.mxu0 %v798
  %1138 = vmatmul.mubr.bf16.gmra.mrb[0].mxu0 %v797
  %v1139 = vpop.f32.mrb[0].mxu0
  %v1140 = vadd.f32 %v848, %v1139
  %v1141 = vpop.f32.mrb[0].mxu0
  %v1142 = vadd.f32 %v852, %v1141
  %v1143 = vpop.f32.mrb[0].mxu0
  %v1144 = vadd.f32 %v848, %v1143
  %v1145 = vpop.f32.mrb[0].mxu0
  %v1146 = vadd.f32 %v852, %v1145
  %1147 = vmatprep.mubr.bf16.mxu0 %v800
  %1148 = vmatmul.mubr.bf16.gmra.mrb[0].mxu0 %v799
  %v1149 = vpop.f32.mrb[0].mxu0
  %v1150 = vadd.f32 %v848, %v1149
  %v1151 = vpop.f32.mrb[0].mxu0
  %v1152 = vadd.f32 %v852, %v1151
  %v1153 = vpop.f32.mrb[0].mxu0
  %v1154 = vadd.f32 %v848, %v1153
  %v1155 = vpop.f32.mrb[0].mxu0
  %v1156 = vadd.f32 %v852, %v1155
  %1157 = vmatprep.mubr.bf16.mxu0 %v802
  %1158 = vmatmul.mubr.bf16.gmra.mrb[0].mxu0 %v801
  %v1159 = vpop.f32.mrb[0].mxu0
  %v1160 = vadd.f32 %v848, %v1159
  %v1161 = vpop.f32.mrb[0].mxu0
  %v1162 = vadd.f32 %v852, %v1161
  %v1163 = vpop.f32.mrb[0].mxu0
  %v1164 = vadd.f32 %v848, %v1163
  %v1165 = vpop.f32.mrb[0].mxu0
  %v1166 = vadd.f32 %v852, %v1165
  %1167 = vmatprep.mubr.bf16.mxu0 %v804
  %1168 = vmatmul.mubr.bf16.gmra.mrb[0].mxu0 %v803
  %v1169 = vpop.f32.mrb[0].mxu0
  %v1170 = vadd.f32 %v848, %v1169
  %v1171 = vpop.f32.mrb[0].mxu0
  %v1172 = vadd.f32 %v852, %v1171
  %v1173 = vpop.f32.mrb[0].mxu0
  %v1174 = vadd.f32 %v848, %v1173
  %v1175 = vpop.f32.mrb[0].mxu0
  %v1176 = vadd.f32 %v852, %v1175
  %1177 = vmatprep.mubr.bf16.mxu0 %v806
  %1178 = vmatmul.mubr.bf16.gmra.mrb[0].mxu0 %v805
  %v1179 = vpop.f32.mrb[0].mxu0
  %v1180 = vadd.f32 %v848, %v1179
  %v1181 = vpop.f32.mrb[0].mxu0
  %v1182 = vadd.f32 %v852, %v1181
  %v1183 = vpop.f32.mrb[0].mxu0
  %v1184 = vadd.f32 %v848, %v1183
  %v1185 = vpop.f32.mrb[0].mxu0
  %v1186 = vadd.f32 %v852, %v1185
  %1187 = vmatprep.mubr.bf16.mxu0 %v808
  %1188 = vmatmul.mubr.bf16.gmra.mrb[0].mxu0 %v807
  %v1189 = vpop.f32.mrb[0].mxu0
  %v1190 = vadd.f32 %v848, %v1189
  %v1191 = vpop.f32.mrb[0].mxu0
  %v1192 = vadd.f32 %v852, %v1191
  %v1193 = vpop.f32.mrb[0].mxu0
  %v1194 = vadd.f32 %v848, %v1193
  %v1195 = vpop.f32.mrb[0].mxu0
  %v1196 = vadd.f32 %v852, %v1195
  %1197 = vmatprep.mubr.bf16.mxu0 %v810
  %1198 = vmatmul.mubr.bf16.gmra.mrb[0].mxu0 %v809
  %v1199 = vpop.f32.mrb[0].mxu0
  %v1200 = vadd.f32 %v848, %v1199
  %v1201 = vpop.f32.mrb[0].mxu0
  %v1202 = vadd.f32 %v852, %v1201
  %v1203 = vpop.f32.mrb[0].mxu0
  %v1204 = vadd.f32 %v848, %v1203
  %v1205 = vpop.f32.mrb[0].mxu0
  %v1206 = vadd.f32 %v852, %v1205
  %1207 = vdwg.mxu0
  %v1208 = vmax.f32 %v1050, 0.0
  %v1209 = vmax.f32 %v1052, 0.0
  %v1210 = vmax.f32 %v1054, 0.0
  %v1211 = vmax.f32 %v1056, 0.0
  %v1212 = vmax.f32 %v1060, 0.0
  %v1213 = vmax.f32 %v1062, 0.0
  %v1214 = vmax.f32 %v1064, 0.0
  %v1215 = vmax.f32 %v1066, 0.0
  %v1216 = vmax.f32 %v1070, 0.0
  %v1217 = vmax.f32 %v1072, 0.0
  %v1218 = vmax.f32 %v1074, 0.0
  %v1219 = vmax.f32 %v1076, 0.0
  %v1220 = vmax.f32 %v1080, 0.0
  %v1221 = vmax.f32 %v1082, 0.0
  %v1222 = vmax.f32 %v1084, 0.0
  %v1223 = vmax.f32 %v1086, 0.0
  %v1224 = vmax.f32 %v1090, 0.0
  %v1225 = vmax.f32 %v1092, 0.0
  %v1226 = vmax.f32 %v1094, 0.0
  %v1227 = vmax.f32 %v1096, 0.0
  %v1228 = vmax.f32 %v1100, 0.0
  %v1229 = vmax.f32 %v1102, 0.0
  %v1230 = vmax.f32 %v1104, 0.0
  %v1231 = vmax.f32 %v1106, 0.0
  %v1232 = vmax.f32 %v1110, 0.0
  %v1233 = vmax.f32 %v1112, 0.0
  %v1234 = vmax.f32 %v1114, 0.0
  %v1235 = vmax.f32 %v1116, 0.0
  %v1236 = vmax.f32 %v1120, 0.0
  %v1237 = vmax.f32 %v1122, 0.0
  %v1238 = vmax.f32 %v1124, 0.0
  %v1239 = vmax.f32 %v1126, 0.0
  %v1240 = vmax.f32 %v1130, 0.0
  %v1241 = vmax.f32 %v1132, 0.0
  %v1242 = vmax.f32 %v1134, 0.0
  %v1243 = vmax.f32 %v1136, 0.0
  %v1244 = vmax.f32 %v1140, 0.0
  %v1245 = vmax.f32 %v1142, 0.0
  %v1246 = vmax.f32 %v1144, 0.0
  %v1247 = vmax.f32 %v1146, 0.0
  %v1248 = vmax.f32 %v1150, 0.0
  %v1249 = vmax.f32 %v1152, 0.0
  %v1250 = vmax.f32 %v1154, 0.0
  %v1251 = vmax.f32 %v1156, 0.0
  %v1252 = vmax.f32 %v1160, 0.0
  %v1253 = vmax.f32 %v1162, 0.0
  %v1254 = vmax.f32 %v1164, 0.0
  %v1255 = vmax.f32 %v1166, 0.0
  %v1256 = vmax.f32 %v1170, 0.0
  %v1257 = vmax.f32 %v1172, 0.0
  %v1258 = vmax.f32 %v1174, 0.0
  %v1259 = vmax.f32 %v1176, 0.0
  %v1260 = vmax.f32 %v1180, 0.0
  %v1261 = vmax.f32 %v1182, 0.0
  %v1262 = vmax.f32 %v1184, 0.0
  %v1263 = vmax.f32 %v1186, 0.0
  %v1264 = vmax.f32 %v1190, 0.0
  %v1265 = vmax.f32 %v1192, 0.0
  %v1266 = vmax.f32 %v1194, 0.0
  %v1267 = vmax.f32 %v1196, 0.0
  %v1268 = vmax.f32 %v1200, 0.0
  %v1269 = vmax.f32 %v1202, 0.0
  %v1270 = vmax.f32 %v1204, 0.0
  %v1271 = vmax.f32 %v1206, 0.0
  %v1272 = vld [vmem:[%s7] sm:$0x3]
  %v1273 = vunpack.c.l.bf16 %v1272
  %v1275 = vlaneseq
  %v1276 = vshrl.u32 %v1275, 7
  %v1277 = vsub.s32 0, %v1276
  %v1278 = vrot.slane %v1273, %v1277
  %v1279 = vlaneseq
  %v1280 = vshrl.u32 %v1279, 7
  %v1281 = vsub.s32 2, %v1280
  %v1282 = vrot.slane %v1273, %v1281
  %v1285 = vlaneseq
  %v1286 = vshrl.u32 %v1285, 7
  %v1287 = vsub.s32 0, %v1286
  %v1288 = vrot.slane %v1278, %v1287
  %v1289 = vlaneseq
  %v1290 = vshrl.u32 %v1289, 7
  %v1291 = vsub.s32 0, %v1290
  %v1292 = vrot.slane %v1282, %v1291
  %v1293 = vmul.f32 %v1208, %v1288
  %v1294 = vmul.f32 %v1209, %v1292
  %v1295 = vmul.f32 %v1210, %v1288
  %v1296 = vmul.f32 %v1211, %v1292
  %v1297 = vmul.f32 %v1212, %v1288
  %v1298 = vmul.f32 %v1213, %v1292
  %v1299 = vmul.f32 %v1214, %v1288
  %v1300 = vmul.f32 %v1215, %v1292
  %v1301 = vmul.f32 %v1216, %v1288
  %v1302 = vmul.f32 %v1217, %v1292
  %v1303 = vmul.f32 %v1218, %v1288
  %v1304 = vmul.f32 %v1219, %v1292
  %v1305 = vmul.f32 %v1220, %v1288
  %v1306 = vmul.f32 %v1221, %v1292
  %v1307 = vmul.f32 %v1222, %v1288
  %v1308 = vmul.f32 %v1223, %v1292
  %v1309 = vmul.f32 %v1224, %v1288
  %v1310 = vmul.f32 %v1225, %v1292
  %v1311 = vmul.f32 %v1226, %v1288
  %v1312 = vmul.f32 %v1227, %v1292
  %v1313 = vmul.f32 %v1228, %v1288
  %v1314 = vmul.f32 %v1229, %v1292
  %v1315 = vmul.f32 %v1230, %v1288
  %v1316 = vmul.f32 %v1231, %v1292
  %v1317 = vmul.f32 %v1232, %v1288
  %v1318 = vmul.f32 %v1233, %v1292
  %v1319 = vmul.f32 %v1234, %v1288
  %v1320 = vmul.f32 %v1235, %v1292
  %v1321 = vmul.f32 %v1236, %v1288
  %v1322 = vmul.f32 %v1237, %v1292
  %v1323 = vmul.f32 %v1238, %v1288
  %v1324 = vmul.f32 %v1239, %v1292
  %v1325 = vmul.f32 %v1240, %v1288
  %v1326 = vmul.f32 %v1241, %v1292
  %v1327 = vmul.f32 %v1242, %v1288
  %v1328 = vmul.f32 %v1243, %v1292
  %v1329 = vmul.f32 %v1244, %v1288
  %v1330 = vmul.f32 %v1245, %v1292
  %v1331 = vmul.f32 %v1246, %v1288
  %v1332 = vmul.f32 %v1247, %v1292
  %v1333 = vmul.f32 %v1248, %v1288
  %v1334 = vmul.f32 %v1249, %v1292
  %v1335 = vmul.f32 %v1250, %v1288
  %v1336 = vmul.f32 %v1251, %v1292
  %v1337 = vmul.f32 %v1252, %v1288
  %v1338 = vmul.f32 %v1253, %v1292
  %v1339 = vmul.f32 %v1254, %v1288
  %v1340 = vmul.f32 %v1255, %v1292
  %v1341 = vmul.f32 %v1256, %v1288
  %v1342 = vmul.f32 %v1257, %v1292
  %v1343 = vmul.f32 %v1258, %v1288
  %v1344 = vmul.f32 %v1259, %v1292
  %v1345 = vmul.f32 %v1260, %v1288
  %v1346 = vmul.f32 %v1261, %v1292
  %v1347 = vmul.f32 %v1262, %v1288
  %v1348 = vmul.f32 %v1263, %v1292
  %v1349 = vmul.f32 %v1264, %v1288
  %v1350 = vmul.f32 %v1265, %v1292
  %v1351 = vmul.f32 %v1266, %v1288
  %v1352 = vmul.f32 %v1267, %v1292
  %v1353 = vmul.f32 %v1268, %v1288
  %v1354 = vmul.f32 %v1269, %v1292
  %v1355 = vmul.f32 %v1270, %v1288
  %v1356 = vmul.f32 %v1271, %v1292
  %v1357 = vadd.f32 %v1293, %v1294
  %1358 = vadd.xlane.f32.xlu0 %v1357
  %v1359 = vpop.xlane.xlu0 %1358
  %v1360 = vadd.f32 %v1295, %v1296
  %1361 = vadd.xlane.f32.xlu0 %v1360
  %v1362 = vpop.xlane.xlu0 %1361
  %v1363 = vadd.f32 %v1297, %v1298
  %1364 = vadd.xlane.f32.xlu0 %v1363
  %v1365 = vpop.xlane.xlu0 %1364
  %v1366 = vadd.f32 %v1299, %v1300
  %1367 = vadd.xlane.f32.xlu0 %v1366
  %v1368 = vpop.xlane.xlu0 %1367
  %v1369 = vadd.f32 %v1301, %v1302
  %1370 = vadd.xlane.f32.xlu0 %v1369
  %v1371 = vpop.xlane.xlu0 %1370
  %v1372 = vadd.f32 %v1303, %v1304
  %1373 = vadd.xlane.f32.xlu0 %v1372
  %v1374 = vpop.xlane.xlu0 %1373
  %v1375 = vadd.f32 %v1305, %v1306
  %1376 = vadd.xlane.f32.xlu0 %v1375
  %v1377 = vpop.xlane.xlu0 %1376
  %v1378 = vadd.f32 %v1307, %v1308
  %1379 = vadd.xlane.f32.xlu0 %v1378
  %v1380 = vpop.xlane.xlu0 %1379
  %v1381 = vadd.f32 %v1309, %v1310
  %1382 = vadd.xlane.f32.xlu0 %v1381
  %v1383 = vpop.xlane.xlu0 %1382
  %v1384 = vadd.f32 %v1311, %v1312
  %1385 = vadd.xlane.f32.xlu0 %v1384
  %v1386 = vpop.xlane.xlu0 %1385
  %v1387 = vadd.f32 %v1313, %v1314
  %1388 = vadd.xlane.f32.xlu0 %v1387
  %v1389 = vpop.xlane.xlu0 %1388
  %v1390 = vadd.f32 %v1315, %v1316
  %1391 = vadd.xlane.f32.xlu0 %v1390
  %v1392 = vpop.xlane.xlu0 %1391
  %v1393 = vadd.f32 %v1317, %v1318
  %1394 = vadd.xlane.f32.xlu0 %v1393
  %v1395 = vpop.xlane.xlu0 %1394
  %v1396 = vadd.f32 %v1319, %v1320
  %1397 = vadd.xlane.f32.xlu0 %v1396
  %v1398 = vpop.xlane.xlu0 %1397
  %v1399 = vadd.f32 %v1321, %v1322
  %1400 = vadd.xlane.f32.xlu0 %v1399
  %v1401 = vpop.xlane.xlu0 %1400
  %v1402 = vadd.f32 %v1323, %v1324
  %1403 = vadd.xlane.f32.xlu0 %v1402
  %v1404 = vpop.xlane.xlu0 %1403
  %v1405 = vadd.f32 %v1325, %v1326
  %1406 = vadd.xlane.f32.xlu0 %v1405
  %v1407 = vpop.xlane.xlu0 %1406
  %v1408 = vadd.f32 %v1327, %v1328
  %1409 = vadd.xlane.f32.xlu0 %v1408
  %v1410 = vpop.xlane.xlu0 %1409
  %v1411 = vadd.f32 %v1329, %v1330
  %1412 = vadd.xlane.f32.xlu0 %v1411
  %v1413 = vpop.xlane.xlu0 %1412
  %v1414 = vadd.f32 %v1331, %v1332
  %1415 = vadd.xlane.f32.xlu0 %v1414
  %v1416 = vpop.xlane.xlu0 %1415
  %v1417 = vadd.f32 %v1333, %v1334
  %1418 = vadd.xlane.f32.xlu0 %v1417
  %v1419 = vpop.xlane.xlu0 %1418
  %v1420 = vadd.f32 %v1335, %v1336
  %1421 = vadd.xlane.f32.xlu0 %v1420
  %v1422 = vpop.xlane.xlu0 %1421
  %v1423 = vadd.f32 %v1337, %v1338
  %1424 = vadd.xlane.f32.xlu0 %v1423
  %v1425 = vpop.xlane.xlu0 %1424
  %v1426 = vadd.f32 %v1339, %v1340
  %1427 = vadd.xlane.f32.xlu0 %v1426
  %v1428 = vpop.xlane.xlu0 %1427
  %v1429 = vadd.f32 %v1341, %v1342
  %1430 = vadd.xlane.f32.xlu0 %v1429
  %v1431 = vpop.xlane.xlu0 %1430
  %v1432 = vadd.f32 %v1343, %v1344
  %1433 = vadd.xlane.f32.xlu0 %v1432
  %v1434 = vpop.xlane.xlu0 %1433
  %v1435 = vadd.f32 %v1345, %v1346
  %1436 = vadd.xlane.f32.xlu0 %v1435
  %v1437 = vpop.xlane.xlu0 %1436
  %v1438 = vadd.f32 %v1347, %v1348
  %1439 = vadd.xlane.f32.xlu0 %v1438
  %v1440 = vpop.xlane.xlu0 %1439
  %v1441 = vadd.f32 %v1349, %v1350
  %1442 = vadd.xlane.f32.xlu0 %v1441
  %v1443 = vpop.xlane.xlu0 %1442
  %v1444 = vadd.f32 %v1351, %v1352
  %1445 = vadd.xlane.f32.xlu0 %v1444
  %v1446 = vpop.xlane.xlu0 %1445
  %v1447 = vadd.f32 %v1353, %v1354
  %1448 = vadd.xlane.f32.xlu0 %v1447
  %v1449 = vpop.xlane.xlu0 %1448
  %v1450 = vadd.f32 %v1355, %v1356
  %1451 = vadd.xlane.f32.xlu0 %v1450
  %v1452 = vpop.xlane.xlu0 %1451
  %s1453 = sld [smem:[#allocation2]]
  %v1454 = vstv %s1453
  %v1455 = vadd.f32 %v1359, %v1454
  %v1456 = vadd.f32 %v1362, %v1454
  %v1457 = vadd.f32 %v1365, %v1454
  %v1458 = vadd.f32 %v1368, %v1454
  %v1459 = vadd.f32 %v1371, %v1454
  %v1460 = vadd.f32 %v1374, %v1454
  %v1461 = vadd.f32 %v1377, %v1454
  %v1462 = vadd.f32 %v1380, %v1454
  %v1463 = vadd.f32 %v1383, %v1454
  %v1464 = vadd.f32 %v1386, %v1454
  %v1465 = vadd.f32 %v1389, %v1454
  %v1466 = vadd.f32 %v1392, %v1454
  %v1467 = vadd.f32 %v1395, %v1454
  %v1468 = vadd.f32 %v1398, %v1454
  %v1469 = vadd.f32 %v1401, %v1454
  %v1470 = vadd.f32 %v1404, %v1454
  %v1471 = vadd.f32 %v1407, %v1454
  %v1472 = vadd.f32 %v1410, %v1454
  %v1473 = vadd.f32 %v1413, %v1454
  %v1474 = vadd.f32 %v1416, %v1454
  %v1475 = vadd.f32 %v1419, %v1454
  %v1476 = vadd.f32 %v1422, %v1454
  %v1477 = vadd.f32 %v1425, %v1454
  %v1478 = vadd.f32 %v1428, %v1454
  %v1479 = vadd.f32 %v1431, %v1454
  %v1480 = vadd.f32 %v1434, %v1454
  %v1481 = vadd.f32 %v1437, %v1454
  %v1482 = vadd.f32 %v1440, %v1454
  %v1483 = vadd.f32 %v1443, %v1454
  %v1484 = vadd.f32 %v1446, %v1454
  %v1485 = vadd.f32 %v1449, %v1454
  %v1486 = vadd.f32 %v1452, %v1454
  %v1487 = vxor.u32 %v1455, 2147483648
  %v1488 = vxor.u32 %v1456, 2147483648
  %v1489 = vxor.u32 %v1457, 2147483648
  %v1490 = vxor.u32 %v1458, 2147483648
  %v1491 = vxor.u32 %v1459, 2147483648
  %v1492 = vxor.u32 %v1460, 2147483648
  %v1493 = vxor.u32 %v1461, 2147483648
  %v1494 = vxor.u32 %v1462, 2147483648
  %v1495 = vxor.u32 %v1463, 2147483648
  %v1496 = vxor.u32 %v1464, 2147483648
  %v1497 = vxor.u32 %v1465, 2147483648
  %v1498 = vxor.u32 %v1466, 2147483648
  %v1499 = vxor.u32 %v1467, 2147483648
  %v1500 = vxor.u32 %v1468, 2147483648
  %v1501 = vxor.u32 %v1469, 2147483648
  %v1502 = vxor.u32 %v1470, 2147483648
  %v1503 = vxor.u32 %v1471, 2147483648
  %v1504 = vxor.u32 %v1472, 2147483648
  %v1505 = vxor.u32 %v1473, 2147483648
  %v1506 = vxor.u32 %v1474, 2147483648
  %v1507 = vxor.u32 %v1475, 2147483648
  %v1508 = vxor.u32 %v1476, 2147483648
  %v1509 = vxor.u32 %v1477, 2147483648
  %v1510 = vxor.u32 %v1478, 2147483648
  %v1511 = vxor.u32 %v1479, 2147483648
  %v1512 = vxor.u32 %v1480, 2147483648
  %v1513 = vxor.u32 %v1481, 2147483648
  %v1514 = vxor.u32 %v1482, 2147483648
  %v1515 = vxor.u32 %v1483, 2147483648
  %v1516 = vxor.u32 %v1484, 2147483648
  %v1517 = vxor.u32 %v1485, 2147483648
  %v1518 = vxor.u32 %v1486, 2147483648
  %v1519 = vmul.f32 %v1487, 1.442695
  %v1520 = vpow.pop %v1519
  %v1521 = vmul.f32 %v1488, 1.442695
  %v1522 = vpow.pop %v1521
  %v1523 = vmul.f32 %v1489, 1.442695
  %v1524 = vpow.pop %v1523
  %v1525 = vmul.f32 %v1490, 1.442695
  %v1526 = vpow.pop %v1525
  %v1527 = vmul.f32 %v1491, 1.442695
  %v1528 = vpow.pop %v1527
  %v1529 = vmul.f32 %v1492, 1.442695
  %v1530 = vpow.pop %v1529
  %v1531 = vmul.f32 %v1493, 1.442695
  %v1532 = vpow.pop %v1531
  %v1533 = vmul.f32 %v1494, 1.442695
  %v1534 = vpow.pop %v1533
  %v1535 = vmul.f32 %v1495, 1.442695
  %v1536 = vpow.pop %v1535
  %v1537 = vmul.f32 %v1496, 1.442695
  %v1538 = vpow.pop %v1537
  %v1539 = vmul.f32 %v1497, 1.442695
  %v1540 = vpow.pop %v1539
  %v1541 = vmul.f32 %v1498, 1.442695
  %v1542 = vpow.pop %v1541
  %v1543 = vmul.f32 %v1499, 1.442695
  %v1544 = vpow.pop %v1543
  %v1545 = vmul.f32 %v1500, 1.442695
  %v1546 = vpow.pop %v1545
  %v1547 = vmul.f32 %v1501, 1.442695
  %v1548 = vpow.pop %v1547
  %v1549 = vmul.f32 %v1502, 1.442695
  %v1550 = vpow.pop %v1549
  %v1551 = vmul.f32 %v1503, 1.442695
  %v1552 = vpow.pop %v1551
  %v1553 = vmul.f32 %v1504, 1.442695
  %v1554 = vpow.pop %v1553
  %v1555 = vmul.f32 %v1505, 1.442695
  %v1556 = vpow.pop %v1555
  %v1557 = vmul.f32 %v1506, 1.442695
  %v1558 = vpow.pop %v1557
  %v1559 = vmul.f32 %v1507, 1.442695
  %v1560 = vpow.pop %v1559
  %v1561 = vmul.f32 %v1508, 1.442695
  %v1562 = vpow.pop %v1561
  %v1563 = vmul.f32 %v1509, 1.442695
  %v1564 = vpow.pop %v1563
  %v1565 = vmul.f32 %v1510, 1.442695
  %v1566 = vpow.pop %v1565
  %v1567 = vmul.f32 %v1511, 1.442695
  %v1568 = vpow.pop %v1567
  %v1569 = vmul.f32 %v1512, 1.442695
  %v1570 = vpow.pop %v1569
  %v1571 = vmul.f32 %v1513, 1.442695
  %v1572 = vpow.pop %v1571
  %v1573 = vmul.f32 %v1514, 1.442695
  %v1574 = vpow.pop %v1573
  %v1575 = vmul.f32 %v1515, 1.442695
  %v1576 = vpow.pop %v1575
  %v1577 = vmul.f32 %v1516, 1.442695
  %v1578 = vpow.pop %v1577
  %v1579 = vmul.f32 %v1517, 1.442695
  %v1580 = vpow.pop %v1579
  %v1581 = vmul.f32 %v1518, 1.442695
  %v1582 = vpow.pop %v1581
  %v1583 = vadd.f32 %v1520, 1.0
  %v1584 = vadd.f32 %v1522, 1.0
  %v1585 = vadd.f32 %v1524, 1.0
  %v1586 = vadd.f32 %v1526, 1.0
  %v1587 = vadd.f32 %v1528, 1.0
  %v1588 = vadd.f32 %v1530, 1.0
  %v1589 = vadd.f32 %v1532, 1.0
  %v1590 = vadd.f32 %v1534, 1.0
  %v1591 = vadd.f32 %v1536, 1.0
  %v1592 = vadd.f32 %v1538, 1.0
  %v1593 = vadd.f32 %v1540, 1.0
  %v1594 = vadd.f32 %v1542, 1.0
  %v1595 = vadd.f32 %v1544, 1.0
  %v1596 = vadd.f32 %v1546, 1.0
  %v1597 = vadd.f32 %v1548, 1.0
  %v1598 = vadd.f32 %v1550, 1.0
  %v1599 = vadd.f32 %v1552, 1.0
  %v1600 = vadd.f32 %v1554, 1.0
  %v1601 = vadd.f32 %v1556, 1.0
  %v1602 = vadd.f32 %v1558, 1.0
  %v1603 = vadd.f32 %v1560, 1.0
  %v1604 = vadd.f32 %v1562, 1.0
  %v1605 = vadd.f32 %v1564, 1.0
  %v1606 = vadd.f32 %v1566, 1.0
  %v1607 = vadd.f32 %v1568, 1.0
  %v1608 = vadd.f32 %v1570, 1.0
  %v1609 = vadd.f32 %v1572, 1.0
  %v1610 = vadd.f32 %v1574, 1.0
  %v1611 = vadd.f32 %v1576, 1.0
  %v1612 = vadd.f32 %v1578, 1.0
  %v1613 = vadd.f32 %v1580, 1.0
  %v1614 = vadd.f32 %v1582, 1.0
  %v1615 = vrcp.pop %v1583
  %v1616 = vmul.f32 1.0, %v1615
  %v1617 = vrcp.pop %v1584
  %v1618 = vmul.f32 1.0, %v1617
  %v1619 = vrcp.pop %v1585
  %v1620 = vmul.f32 1.0, %v1619
  %v1621 = vrcp.pop %v1586
  %v1622 = vmul.f32 1.0, %v1621
  %v1623 = vrcp.pop %v1587
  %v1624 = vmul.f32 1.0, %v1623
  %v1625 = vrcp.pop %v1588
  %v1626 = vmul.f32 1.0, %v1625
  %v1627 = vrcp.pop %v1589
  %v1628 = vmul.f32 1.0, %v1627
  %v1629 = vrcp.pop %v1590
  %v1630 = vmul.f32 1.0, %v1629
  %v1631 = vrcp.pop %v1591
  %v1632 = vmul.f32 1.0, %v1631
  %v1633 = vrcp.pop %v1592
  %v1634 = vmul.f32 1.0, %v1633
  %v1635 = vrcp.pop %v1593
  %v1636 = vmul.f32 1.0, %v1635
  %v1637 = vrcp.pop %v1594
  %v1638 = vmul.f32 1.0, %v1637
  %v1639 = vrcp.pop %v1595
  %v1640 = vmul.f32 1.0, %v1639
  %v1641 = vrcp.pop %v1596
  %v1642 = vmul.f32 1.0, %v1641
  %v1643 = vrcp.pop %v1597
  %v1644 = vmul.f32 1.0, %v1643
  %v1645 = vrcp.pop %v1598
  %v1646 = vmul.f32 1.0, %v1645
  %v1647 = vrcp.pop %v1599
  %v1648 = vmul.f32 1.0, %v1647
  %v1649 = vrcp.pop %v1600
  %v1650 = vmul.f32 1.0, %v1649
  %v1651 = vrcp.pop %v1601
  %v1652 = vmul.f32 1.0, %v1651
  %v1653 = vrcp.pop %v1602
  %v1654 = vmul.f32 1.0, %v1653
  %v1655 = vrcp.pop %v1603
  %v1656 = vmul.f32 1.0, %v1655
  %v1657 = vrcp.pop %v1604
  %v1658 = vmul.f32 1.0, %v1657
  %v1659 = vrcp.pop %v1605
  %v1660 = vmul.f32 1.0, %v1659
  %v1661 = vrcp.pop %v1606
  %v1662 = vmul.f32 1.0, %v1661
  %v1663 = vrcp.pop %v1607
  %v1664 = vmul.f32 1.0, %v1663
  %v1665 = vrcp.pop %v1608
  %v1666 = vmul.f32 1.0, %v1665
  %v1667 = vrcp.pop %v1609
  %v1668 = vmul.f32 1.0, %v1667
  %v1669 = vrcp.pop %v1610
  %v1670 = vmul.f32 1.0, %v1669
  %v1671 = vrcp.pop %v1611
  %v1672 = vmul.f32 1.0, %v1671
  %v1673 = vrcp.pop %v1612
  %v1674 = vmul.f32 1.0, %v1673
  %v1675 = vrcp.pop %v1613
  %v1676 = vmul.f32 1.0, %v1675
  %v1677 = vrcp.pop %v1614
  %v1678 = vmul.f32 1.0, %v1677
  %vm1679 = vcmask 7168
  %1680 = vst.msk [vmem:[%s9] sm:$0xff] %vm1679, %v1616
  %1681 = vst.msk [vmem:[%s9 + $0x8] sm:$0xff] %vm1679, %v1618
  %1682 = vst.msk [vmem:[%s9 + $0x10] sm:$0xff] %vm1679, %v1620
  %1683 = vst.msk [vmem:[%s9 + $0x18] sm:$0xff] %vm1679, %v1622
  %1684 = vst.msk [vmem:[%s9 + $0x20] sm:$0xff] %vm1679, %v1624
  %1685 = vst.msk [vmem:[%s9 + $0x28] sm:$0xff] %vm1679, %v1626
  %1686 = vst.msk [vmem:[%s9 + $0x30] sm:$0xff] %vm1679, %v1628
  %1687 = vst.msk [vmem:[%s9 + $0x38] sm:$0xff] %vm1679, %v1630
  %1688 = vst.msk [vmem:[%s9 + $0x40] sm:$0xff] %vm1679, %v1632
  %1689 = vst.msk [vmem:[%s9 + $0x48] sm:$0xff] %vm1679, %v1634
  %1690 = vst.msk [vmem:[%s9 + $0x50] sm:$0xff] %vm1679, %v1636
  %1691 = vst.msk [vmem:[%s9 + $0x58] sm:$0xff] %vm1679, %v1638
  %1692 = vst.msk [vmem:[%s9 + $0x60] sm:$0xff] %vm1679, %v1640
  %1693 = vst.msk [vmem:[%s9 + $0x68] sm:$0xff] %vm1679, %v1642
  %1694 = vst.msk [vmem:[%s9 + $0x70] sm:$0xff] %vm1679, %v1644
  %1695 = vst.msk [vmem:[%s9 + $0x78] sm:$0xff] %vm1679, %v1646
  %1696 = vst.msk [vmem:[%s9 + $0x80] sm:$0xff] %vm1679, %v1648
  %1697 = vst.msk [vmem:[%s9 + $0x88] sm:$0xff] %vm1679, %v1650
  %1698 = vst.msk [vmem:[%s9 + $0x90] sm:$0xff] %vm1679, %v1652
  %1699 = vst.msk [vmem:[%s9 + $0x98] sm:$0xff] %vm1679, %v1654
  %1700 = vst.msk [vmem:[%s9 + $0xa0] sm:$0xff] %vm1679, %v1656
  %1701 = vst.msk [vmem:[%s9 + $0xa8] sm:$0xff] %vm1679, %v1658
  %1702 = vst.msk [vmem:[%s9 + $0xb0] sm:$0xff] %vm1679, %v1660
  %1703 = vst.msk [vmem:[%s9 + $0xb8] sm:$0xff] %vm1679, %v1662
  %1704 = vst.msk [vmem:[%s9 + $0xc0] sm:$0xff] %vm1679, %v1664
  %1705 = vst.msk [vmem:[%s9 + $0xc8] sm:$0xff] %vm1679, %v1666
  %1706 = vst.msk [vmem:[%s9 + $0xd0] sm:$0xff] %vm1679, %v1668
  %1707 = vst.msk [vmem:[%s9 + $0xd8] sm:$0xff] %vm1679, %v1670
  %1708 = vst.msk [vmem:[%s9 + $0xe0] sm:$0xff] %vm1679, %v1672
  %1709 = vst.msk [vmem:[%s9 + $0xe8] sm:$0xff] %vm1679, %v1674
  %1710 = vst.msk [vmem:[%s9 + $0xf0] sm:$0xff] %vm1679, %v1676
  %1711 = vst.msk [vmem:[%s9 + $0xf8] sm:$0xff] %vm1679, %v1678
  // Predicated region
  $region38: #{tpu_custom_call.1} parent=0 // pred_check
    _
  $region39: #{tpu_custom_call.1} parent=0 // pred_check_branch
    %1713 = sbr.rel (0) target = $region41
  $region40: #{tpu_custom_call.1} parent=0 // pred_region
    _
  $region41: #{tpu_custom_call.1} parent=0 // pred_fallthru
    _
  // Predicated region
  $region42: #{tpu_custom_call.1} parent=0 // pred_check
    _
  $region43: #{tpu_custom_call.1} parent=0 // pred_check_branch
    %1715 = sbr.rel (0) target = $region45
  $region44: #{tpu_custom_call.1} parent=0 // pred_region
    _
  $region45: #{tpu_custom_call.1} parent=0 // pred_fallthru
    _

</llo_original>
